<compile_context>
chip_gen: v6e
topology: v6e:2x2x1
jax: 0.10.0
libtpu: 0.0.40
codegen_flags: <defaults>
</compile_context>

<pallas_src>
import math
import functools

import jax
import jax.numpy as jnp
import numpy as np
from jax.experimental import pallas as pl
from jax.experimental.pallas import tpu as pltpu

# --- model hyper-params (small, consistent with the module) -----------------
D_MODEL = 32      # d_model
NHEAD   = 4       # nhead
HEAD_D  = D_MODEL // NHEAD
SEQ     = 8       # L
BATCH   = 2       # N
EPS     = 1e-5    # nn.LayerNorm default


def _encoder_kernel(src_ref, pos_ref, wqk_ref, wvo_ref, misc_ref,
                    out_ref, attn_ref, *, n_batch, nhead):
    """Single grid step: the whole (N*L, E) problem is resident in VMEM.

    Row r of the slab corresponds to (l = r // n_batch, n = r % n_batch), i.e.
    the rows are the contiguous reshape of the (L, N, E) input.
    """
    nl, e = src_ref.shape
    head_d = e // nhead

    x = src_ref[...].astype(jnp.float32)                      # (N*L, E)
    qk_in = x + pos_ref[...].astype(jnp.float32)               # with_pos_embed

    misc = misc_ref[...].astype(jnp.float32)                   # (6, E)
    bq, bk, bv = misc[0:1, :], misc[1:2, :], misc[2:3, :]       # bq is pre-scaled
    bo, gamma, beta = misc[3:4, :], misc[4:5, :], misc[5:6, :]

    # Fused Q|K projection (scale folded into the Q half of wqk host-side).
    qk = jnp.dot(qk_in, wqk_ref[...], preferred_element_type=jnp.float32)  # (NL, 2E)
    q = qk[:, :e] + bq
    k = qk[:, e:] + bk
    v = jnp.dot(x, wvo_ref[0], preferred_element_type=jnp.float32) + bv

    # Block-diagonal (same-batch) mask: rows are l-major / batch-minor, so two
    # rows belong to the same batch element iff their indices agree mod N.
    rb = jax.lax.broadcasted_iota(jnp.int32, (nl, nl), 0) % n_batch
    cb = jax.lax.broadcasted_iota(jnp.int32, (nl, nl), 1) % n_batch
    same_batch = rb == cb

    for h in range(nhead):                                      # static unroll
        sl = slice(h * head_d, (h + 1) * head_d)
        qh, kh, vh = q[:, sl], k[:, sl], v[:, sl]
        # qh @ kh.T without an explicit transpose (MXU handles the contraction).
        s = jax.lax.dot_general(qh, kh, (((1,), (1,)), ((), ())),
                                preferred_element_type=jnp.float32)   # (NL, NL)
        s = jnp.where(same_batch, s, -1e30)
        s = s - jnp.max(s, axis=-1, keepdims=True)
        p = jnp.exp(s)
        denom = jnp.sum(p, axis=-1, keepdims=True)
        inv = pl.reciprocal(denom, approx=True)                  # EUP slot
        inv = inv * (2.0 - denom * inv)                          # Newton step -> f32 accuracy
        # Write the head result straight into its lane slice (no lane concat).
        attn_ref[:, sl] = jnp.dot(p, vh, preferred_element_type=jnp.float32) * inv

    proj = jnp.dot(attn_ref[...], wvo_ref[1],
                   preferred_element_type=jnp.float32) + bo

    # residual (dropout is identity at eval) + LayerNorm over last dim
    y = x + proj
    mu = jnp.mean(y, axis=-1, keepdims=True)
    var = jnp.mean((y - mu) ** 2, axis=-1, keepdims=True)
    yn = (y - mu) * jax.lax.rsqrt(var + EPS)
    out_ref[...] = (yn * gamma + beta).astype(out_ref.dtype)


@jax.jit
def encoder_forward(src_lne, pos_lne, kp):
    """src_lne, pos_lne: (L, N, E) float32 (PyTorch MultiheadAttention layout).

    kp: packed kernel params from pack_params()."""
    L, N, E = src_lne.shape
    NL = L * N
    # (L, N, E) -> (N*L, E): contiguous, layout-preserving reshape (no transpose,
    # no extra HBM round trip).
    src2 = src_lne.reshape(NL, E)
    pos2 = pos_lne.reshape(NL, E)

    kernel = functools.partial(_encoder_kernel, n_batch=N, nhead=NHEAD)

    out2 = pl.pallas_call(
        kernel,
        out_shape=jax.ShapeDtypeStruct((NL, E), src_lne.dtype),
        grid_spec=pltpu.PrefetchScalarGridSpec(
            num_scalar_prefetch=0,
            grid=(1,),                                        # single step
            in_specs=[
                pl.BlockSpec((NL, E), lambda i: (0, 0)),       # src rows
                pl.BlockSpec((NL, E), lambda i: (0, 0)),       # pos rows
                pl.BlockSpec((E, 2 * E), lambda i: (0, 0)),    # [wq*scale | wk]
                pl.BlockSpec((2, E, E), lambda i: (0, 0, 0)),  # [wv, wo]
                pl.BlockSpec((6, E), lambda i: (0, 0)),        # bq*s,bk,bv,bo,gamma,beta
            ],
            out_specs=pl.BlockSpec((NL, E), lambda i: (0, 0)),
            scratch_shapes=[pltpu.VMEM((NL, E), jnp.float32)], # per-head attn assembly
        ),
        compiler_params=pltpu.CompilerParams(
            dimension_semantics=("arbitrary",)),
    )(src2, pos2, kp["wqk"], kp["wvo"], kp["misc"])

    return out2.reshape(L, N, E)


def pack_params(p):
    """One-time (outside the per-call path) packing of the 12 small params
    into 3 arrays; folds the attention scale into the Q projection."""
    scale = 1.0 / math.sqrt(HEAD_D)
    wqk = jnp.concatenate([p["wq"] * scale, p["wk"]], axis=1)          # (E, 2E)
    wvo = jnp.stack([p["wv"], p["wo"]], axis=0)                        # (2, E, E)
    misc = jnp.concatenate([p["bq"] * scale, p["bk"], p["bv"], p["bo"],
                            p["gamma"], p["beta"]], axis=0)            # (6, E)
    return {"wqk": wqk, "wvo": wvo, "misc": misc}


def encoder_reference(src_lne, pos_lne, params):
    """Pure-JAX reference of the same math (for validation)."""
    L, N, E = src_lne.shape
    x = jnp.transpose(src_lne, (1, 0, 2)).astype(jnp.float32)          # (N, L, E)
    qk = x + jnp.transpose(pos_lne, (1, 0, 2)).astype(jnp.float32)

    q = qk @ params["wq"] + params["bq"]
    k = qk @ params["wk"] + params["bk"]
    v = x @ params["wv"] + params["bv"]

    def split(t):  # (N, L, E) -> (N, H, L, Dh)
        return t.reshape(N, L, NHEAD, HEAD_D).transpose(0, 2, 1, 3)

    qh, kh, vh = split(q), split(k), split(v)
    s = jnp.einsum("nhld,nhmd->nhlm", qh, kh) / math.sqrt(HEAD_D)
    p = jax.nn.softmax(s, axis=-1)
    o = jnp.einsum("nhlm,nhmd->nhld", p, vh)
    o = o.transpose(0, 2, 1, 3).reshape(N, L, E)
    proj = o @ params["wo"] + params["bo"]

    y = x + proj
    mu = jnp.mean(y, axis=-1, keepdims=True)
    var = jnp.mean((y - mu) ** 2, axis=-1, keepdims=True)
    yn = (y - mu) * jax.lax.rsqrt(var + EPS)
    out = yn * params["gamma"] + params["beta"]
    return jnp.transpose(out, (1, 0, 2))                               # (L, N, E)


def make_params(key):
    ks = jax.random.split(key, 8)
    scale = 1.0 / math.sqrt(D_MODEL)
    return {
        "wq": jax.random.normal(ks[0], (D_MODEL, D_MODEL), jnp.float32) * scale,
        "wk": jax.random.normal(ks[1], (D_MODEL, D_MODEL), jnp.float32) * scale,
        "wv": jax.random.normal(ks[2], (D_MODEL, D_MODEL), jnp.float32) * scale,
        "wo": jax.random.normal(ks[3], (D_MODEL, D_MODEL), jnp.float32) * scale,
        "bq": jax.random.normal(ks[4], (1, D_MODEL), jnp.float32) * 0.01,
        "bk": jax.random.normal(ks[5], (1, D_MODEL), jnp.float32) * 0.01,
        "bv": jax.random.normal(ks[6], (1, D_MODEL), jnp.float32) * 0.01,
        "bo": jax.random.normal(ks[7], (1, D_MODEL), jnp.float32) * 0.01,
        "gamma": jnp.ones((1, D_MODEL), jnp.float32),
        "beta": jnp.zeros((1, D_MODEL), jnp.float32),
    }


if __name__ == "__main__":
    key = jax.random.PRNGKey(0)
    k_src, k_pos, k_par = jax.random.split(key, 3)

    src = jax.random.normal(k_src, (SEQ, BATCH, D_MODEL), jnp.float32)  # (L, N, E)
    pos = jax.random.normal(k_pos, (SEQ, BATCH, D_MODEL), jnp.float32)
    params = make_params(k_par)
    kparams = pack_params(params)

    out = jax.block_until_ready(encoder_forward(src, pos, kparams))
    ref = jax.block_until_ready(encoder_reference(src, pos, params))

    np.testing.assert_allclose(np.asarray(out), np.asarray(ref),
                               rtol=2e-4, atol=2e-4)
    print("KERNEL_OK")
</pallas_src>

<mosaic_0001>
module attributes {stable_mosaic.version = 11 : i64} {
  func.func @_encoder_kernel(%arg0: i32, %arg1: memref<16x32xf32, #tpu.memory_space<vmem>>, %arg2: memref<16x32xf32, #tpu.memory_space<vmem>>, %arg3: memref<32x64xf32, #tpu.memory_space<vmem>>, %arg4: memref<2x32x32xf32, #tpu.memory_space<vmem>>, %arg5: memref<6x32xf32, #tpu.memory_space<vmem>>, %arg6: memref<16x32xf32, #tpu.memory_space<vmem>>, %arg7: memref<16x32xf32, #tpu.memory_space<vmem>>) attributes {dimension_semantics = [#tpu.dimension_semantics<arbitrary>], iteration_bounds = array<i64: 1>, scalar_prefetch = 0 : i64, scratch_operands = 1 : i64, tpu.core_type = #tpu.core_type<tc>, window_params = [{pipeline_mode = #tpu.pipeline_mode<synchronous>, transform_indices = @transform_0, window_bounds = array<i64: 16, 32>}, {pipeline_mode = #tpu.pipeline_mode<synchronous>, transform_indices = @transform_1, window_bounds = array<i64: 16, 32>}, {pipeline_mode = #tpu.pipeline_mode<synchronous>, transform_indices = @transform_2, window_bounds = array<i64: 32, 64>}, {pipeline_mode = #tpu.pipeline_mode<synchronous>, transform_indices = @transform_3, window_bounds = array<i64: 2, 32, 32>}, {pipeline_mode = #tpu.pipeline_mode<synchronous>, transform_indices = @transform_4, window_bounds = array<i64: 6, 32>}, {pipeline_mode = #tpu.pipeline_mode<synchronous>, transform_indices = @transform_5, window_bounds = array<i64: 16, 32>}]} {
    %c0 = arith.constant 0 : index
    %c0_0 = arith.constant 0 : index
    %0 = vector.load %arg1[%c0, %c0_0] : memref<16x32xf32, #tpu.memory_space<vmem>>, vector<16x32xf32>
    %c0_1 = arith.constant 0 : index
    %c0_2 = arith.constant 0 : index
    %1 = vector.load %arg2[%c0_1, %c0_2] : memref<16x32xf32, #tpu.memory_space<vmem>>, vector<16x32xf32>
    %2 = arith.addf %0, %1 : vector<16x32xf32>
    %c0_3 = arith.constant 0 : index
    %c0_4 = arith.constant 0 : index
    %3 = vector.load %arg5[%c0_3, %c0_4] : memref<6x32xf32, #tpu.memory_space<vmem>>, vector<6x32xf32>
    %4 = vector.extract_strided_slice %3 {offsets = [0, 0], sizes = [1, 32], strides = [1, 1]} : vector<6x32xf32> to vector<1x32xf32>
    %5 = vector.extract_strided_slice %3 {offsets = [1, 0], sizes = [1, 32], strides = [1, 1]} : vector<6x32xf32> to vector<1x32xf32>
    %6 = vector.extract_strided_slice %3 {offsets = [2, 0], sizes = [1, 32], strides = [1, 1]} : vector<6x32xf32> to vector<1x32xf32>
    %7 = vector.extract_strided_slice %3 {offsets = [3, 0], sizes = [1, 32], strides = [1, 1]} : vector<6x32xf32> to vector<1x32xf32>
    %8 = vector.extract_strided_slice %3 {offsets = [4, 0], sizes = [1, 32], strides = [1, 1]} : vector<6x32xf32> to vector<1x32xf32>
    %9 = vector.extract_strided_slice %3 {offsets = [5, 0], sizes = [1, 32], strides = [1, 1]} : vector<6x32xf32> to vector<1x32xf32>
    %c0_5 = arith.constant 0 : index
    %c0_6 = arith.constant 0 : index
    %10 = vector.load %arg3[%c0_5, %c0_6] : memref<32x64xf32, #tpu.memory_space<vmem>>, vector<32x64xf32>
    %cst = arith.constant dense<0.000000e+00> : vector<16x64xf32>
    %11 = tpu.matmul %2, %10, %cst {dimension_numbers = #tpu.dot_dimension_numbers<[1], [0], [0], [1], [0, 0, 1, 1], [], []>} : vector<16x32xf32>, vector<32x64xf32>, vector<16x64xf32> -> vector<16x64xf32>
    %12 = vector.extract_strided_slice %11 {offsets = [0, 0], sizes = [16, 32], strides = [1, 1]} : vector<16x64xf32> to vector<16x32xf32>
    %13 = vector.broadcast %4 : vector<1x32xf32> to vector<16x32xf32>
    %14 = arith.addf %12, %13 : vector<16x32xf32>
    %15 = vector.extract_strided_slice %11 {offsets = [0, 32], sizes = [16, 32], strides = [1, 1]} : vector<16x64xf32> to vector<16x32xf32>
    %16 = vector.broadcast %5 : vector<1x32xf32> to vector<16x32xf32>
    %17 = arith.addf %15, %16 : vector<16x32xf32>
    %c0_7 = arith.constant 0 : index
    %c0_8 = arith.constant 0 : index
    %c0_9 = arith.constant 0 : index
    %18 = vector.load %arg4[%c0_7, %c0_8, %c0_9] : memref<2x32x32xf32, #tpu.memory_space<vmem>>, vector<1x32x32xf32>
    %19 = vector.shape_cast %18 : vector<1x32x32xf32> to vector<32x32xf32>
    %cst_10 = arith.constant dense<0.000000e+00> : vector<16x32xf32>
    %20 = tpu.matmul %0, %19, %cst_10 {dimension_numbers = #tpu.dot_dimension_numbers<[1], [0], [0], [1], [0, 0, 1, 1], [], []>} : vector<16x32xf32>, vector<32x32xf32>, vector<16x32xf32> -> vector<16x32xf32>
    %21 = vector.broadcast %6 : vector<1x32xf32> to vector<16x32xf32>
    %22 = arith.addf %20, %21 : vector<16x32xf32>
    %23 = tpu.iota {dimensions = array<i32: 0>} : vector<16x16xi32>
    %c2_i32 = arith.constant 2 : i32
    %c0_i32 = arith.constant 0 : i32
    %24 = arith.cmpi eq, %c2_i32, %c0_i32 : i32
    %c1_i32 = arith.constant 1 : i32
    %25 = arith.select %24, %c1_i32, %c2_i32 : i32
    %26 = vector.broadcast %25 : i32 to vector<16x16xi32>
    %27 = arith.remsi %23, %26 : vector<16x16xi32>
    %c0_i32_11 = arith.constant 0 : i32
    %28 = vector.broadcast %c0_i32_11 : i32 to vector<16x16xi32>
    %29 = arith.cmpi ne, %27, %28 : vector<16x16xi32>
    %c0_i32_12 = arith.constant 0 : i32
    %30 = vector.broadcast %c0_i32_12 : i32 to vector<16x16xi32>
    %31 = arith.cmpi slt, %27, %30 : vector<16x16xi32>
    %c0_i32_13 = arith.constant 0 : i32
    %32 = arith.cmpi slt, %25, %c0_i32_13 : i32
    %33 = vector.broadcast %32 : i1 to vector<16x16xi1>
    %34 = vector.broadcast %33 : vector<16x16xi1> to vector<16x16xi1>
    %35 = arith.xori %31, %34 : vector<16x16xi1>
    %36 = arith.andi %35, %29 : vector<16x16xi1>
    %37 = vector.broadcast %25 : i32 to vector<16x16xi32>
    %38 = arith.addi %27, %37 : vector<16x16xi32>
    %39 = arith.select %36, %38, %27 : vector<16x16xi1>, vector<16x16xi32>
    %40 = tpu.iota {dimensions = array<i32: 1>} : vector<16x16xi32>
    %c2_i32_14 = arith.constant 2 : i32
    %c0_i32_15 = arith.constant 0 : i32
    %41 = arith.cmpi eq, %c2_i32_14, %c0_i32_15 : i32
    %c1_i32_16 = arith.constant 1 : i32
    %42 = arith.select %41, %c1_i32_16, %c2_i32_14 : i32
    %43 = vector.broadcast %42 : i32 to vector<16x16xi32>
    %44 = arith.remsi %40, %43 : vector<16x16xi32>
    %c0_i32_17 = arith.constant 0 : i32
    %45 = vector.broadcast %c0_i32_17 : i32 to vector<16x16xi32>
    %46 = arith.cmpi ne, %44, %45 : vector<16x16xi32>
    %c0_i32_18 = arith.constant 0 : i32
    %47 = vector.broadcast %c0_i32_18 : i32 to vector<16x16xi32>
    %48 = arith.cmpi slt, %44, %47 : vector<16x16xi32>
    %c0_i32_19 = arith.constant 0 : i32
    %49 = arith.cmpi slt, %42, %c0_i32_19 : i32
    %50 = vector.broadcast %49 : i1 to vector<16x16xi1>
    %51 = vector.broadcast %50 : vector<16x16xi1> to vector<16x16xi1>
    %52 = arith.xori %48, %51 : vector<16x16xi1>
    %53 = arith.andi %52, %46 : vector<16x16xi1>
    %54 = vector.broadcast %42 : i32 to vector<16x16xi32>
    %55 = arith.addi %44, %54 : vector<16x16xi32>
    %56 = arith.select %53, %55, %44 : vector<16x16xi1>, vector<16x16xi32>
    %57 = arith.cmpi eq, %39, %56 : vector<16x16xi32>
    %58 = vector.extract_strided_slice %14 {offsets = [0, 0], sizes = [16, 8], strides = [1, 1]} : vector<16x32xf32> to vector<16x8xf32>
    %59 = vector.extract_strided_slice %17 {offsets = [0, 0], sizes = [16, 8], strides = [1, 1]} : vector<16x32xf32> to vector<16x8xf32>
    %60 = vector.extract_strided_slice %22 {offsets = [0, 0], sizes = [16, 8], strides = [1, 1]} : vector<16x32xf32> to vector<16x8xf32>
    %cst_20 = arith.constant dense<0.000000e+00> : vector<16x16xf32>
    %61 = tpu.matmul %58, %59, %cst_20 {dimension_numbers = #tpu.dot_dimension_numbers<[1], [1], [0], [0], [0, 0, 1, 0], [], []>} : vector<16x8xf32>, vector<16x8xf32>, vector<16x16xf32> -> vector<16x16xf32>
    %cst_21 = arith.constant -1.000000e+30 : f32
    %62 = vector.broadcast %cst_21 : f32 to vector<16x16xf32>
    %63 = arith.select %57, %61, %62 : vector<16x16xi1>, vector<16x16xf32>
    %cst_22 = arith.constant dense<0xFF800000> : vector<16xf32>
    %64 = vector.multi_reduction <maximumf>, %63, %cst_22 [1] : vector<16x16xf32> to vector<16xf32>
    %65 = vector.shape_cast %64 : vector<16xf32> to vector<16x1xf32>
    %66 = vector.broadcast %65 : vector<16x1xf32> to vector<16x16xf32>
    %67 = arith.subf %63, %66 : vector<16x16xf32>
    %68 = math.exp %67 : vector<16x16xf32>
    %cst_23 = arith.constant dense<0.000000e+00> : vector<16xf32>
    %69 = vector.multi_reduction <add>, %68, %cst_23 [1] : vector<16x16xf32> to vector<16xf32>
    %70 = vector.shape_cast %69 : vector<16xf32> to vector<16x1xf32>
    %71 = tpu.reciprocal %70 {approx = true} : vector<16x1xf32> -> vector<16x1xf32>
    %72 = arith.mulf %70, %71 : vector<16x1xf32>
    %cst_24 = arith.constant 2.000000e+00 : f32
    %73 = vector.broadcast %cst_24 : f32 to vector<16x1xf32>
    %74 = arith.subf %73, %72 : vector<16x1xf32>
    %75 = arith.mulf %71, %74 : vector<16x1xf32>
    %cst_25 = arith.constant dense<0.000000e+00> : vector<16x8xf32>
    %76 = tpu.matmul %68, %60, %cst_25 {dimension_numbers = #tpu.dot_dimension_numbers<[1], [0], [0], [1], [0, 0, 1, 1], [], []>} : vector<16x16xf32>, vector<16x8xf32>, vector<16x8xf32> -> vector<16x8xf32>
    %77 = vector.broadcast %75 : vector<16x1xf32> to vector<16x8xf32>
    %78 = arith.mulf %76, %77 : vector<16x8xf32>
    %c0_26 = arith.constant 0 : index
    %c0_27 = arith.constant 0 : index
    %79 = vector.load %arg7[%c0_26, %c0_27] : memref<16x32xf32, #tpu.memory_space<vmem>>, vector<16x8xf32>
    tpu.vector_store %arg7[%c0_26, %c0_27], %78 {strides = array<i32>} : memref<16x32xf32, #tpu.memory_space<vmem>>, vector<16x8xf32>,
    %80 = vector.extract_strided_slice %14 {offsets = [0, 8], sizes = [16, 8], strides = [1, 1]} : vector<16x32xf32> to vector<16x8xf32>
    %81 = vector.extract_strided_slice %17 {offsets = [0, 8], sizes = [16, 8], strides = [1, 1]} : vector<16x32xf32> to vector<16x8xf32>
    %82 = vector.extract_strided_slice %22 {offsets = [0, 8], sizes = [16, 8], strides = [1, 1]} : vector<16x32xf32> to vector<16x8xf32>
    %cst_28 = arith.constant dense<0.000000e+00> : vector<16x16xf32>
    %83 = tpu.matmul %80, %81, %cst_28 {dimension_numbers = #tpu.dot_dimension_numbers<[1], [1], [0], [0], [0, 0, 1, 0], [], []>} : vector<16x8xf32>, vector<16x8xf32>, vector<16x16xf32> -> vector<16x16xf32>
    %cst_29 = arith.constant -1.000000e+30 : f32
    %84 = vector.broadcast %cst_29 : f32 to vector<16x16xf32>
    %85 = arith.select %57, %83, %84 : vector<16x16xi1>, vector<16x16xf32>
    %cst_30 = arith.constant dense<0xFF800000> : vector<16xf32>
    %86 = vector.multi_reduction <maximumf>, %85, %cst_30 [1] : vector<16x16xf32> to vector<16xf32>
    %87 = vector.shape_cast %86 : vector<16xf32> to vector<16x1xf32>
    %88 = vector.broadcast %87 : vector<16x1xf32> to vector<16x16xf32>
    %89 = arith.subf %85, %88 : vector<16x16xf32>
    %90 = math.exp %89 : vector<16x16xf32>
    %cst_31 = arith.constant dense<0.000000e+00> : vector<16xf32>
    %91 = vector.multi_reduction <add>, %90, %cst_31 [1] : vector<16x16xf32> to vector<16xf32>
    %92 = vector.shape_cast %91 : vector<16xf32> to vector<16x1xf32>
    %93 = tpu.reciprocal %92 {approx = true} : vector<16x1xf32> -> vector<16x1xf32>
    %94 = arith.mulf %92, %93 : vector<16x1xf32>
    %cst_32 = arith.constant 2.000000e+00 : f32
    %95 = vector.broadcast %cst_32 : f32 to vector<16x1xf32>
    %96 = arith.subf %95, %94 : vector<16x1xf32>
    %97 = arith.mulf %93, %96 : vector<16x1xf32>
    %cst_33 = arith.constant dense<0.000000e+00> : vector<16x8xf32>
    %98 = tpu.matmul %90, %82, %cst_33 {dimension_numbers = #tpu.dot_dimension_numbers<[1], [0], [0], [1], [0, 0, 1, 1], [], []>} : vector<16x16xf32>, vector<16x8xf32>, vector<16x8xf32> -> vector<16x8xf32>
    %99 = vector.broadcast %97 : vector<16x1xf32> to vector<16x8xf32>
    %100 = arith.mulf %98, %99 : vector<16x8xf32>
    %c0_34 = arith.constant 0 : index
    %c8 = arith.constant 8 : index
    %101 = vector.load %arg7[%c0_34, %c8] : memref<16x32xf32, #tpu.memory_space<vmem>>, vector<16x8xf32>
    tpu.vector_store %arg7[%c0_34, %c8], %100 {strides = array<i32>} : memref<16x32xf32, #tpu.memory_space<vmem>>, vector<16x8xf32>,
    %102 = vector.extract_strided_slice %14 {offsets = [0, 16], sizes = [16, 8], strides = [1, 1]} : vector<16x32xf32> to vector<16x8xf32>
    %103 = vector.extract_strided_slice %17 {offsets = [0, 16], sizes = [16, 8], strides = [1, 1]} : vector<16x32xf32> to vector<16x8xf32>
    %104 = vector.extract_strided_slice %22 {offsets = [0, 16], sizes = [16, 8], strides = [1, 1]} : vector<16x32xf32> to vector<16x8xf32>
    %cst_35 = arith.constant dense<0.000000e+00> : vector<16x16xf32>
    %105 = tpu.matmul %102, %103, %cst_35 {dimension_numbers = #tpu.dot_dimension_numbers<[1], [1], [0], [0], [0, 0, 1, 0], [], []>} : vector<16x8xf32>, vector<16x8xf32>, vector<16x16xf32> -> vector<16x16xf32>
    %cst_36 = arith.constant -1.000000e+30 : f32
    %106 = vector.broadcast %cst_36 : f32 to vector<16x16xf32>
    %107 = arith.select %57, %105, %106 : vector<16x16xi1>, vector<16x16xf32>
    %cst_37 = arith.constant dense<0xFF800000> : vector<16xf32>
    %108 = vector.multi_reduction <maximumf>, %107, %cst_37 [1] : vector<16x16xf32> to vector<16xf32>
    %109 = vector.shape_cast %108 : vector<16xf32> to vector<16x1xf32>
    %110 = vector.broadcast %109 : vector<16x1xf32> to vector<16x16xf32>
    %111 = arith.subf %107, %110 : vector<16x16xf32>
    %112 = math.exp %111 : vector<16x16xf32>
    %cst_38 = arith.constant dense<0.000000e+00> : vector<16xf32>
    %113 = vector.multi_reduction <add>, %112, %cst_38 [1] : vector<16x16xf32> to vector<16xf32>
    %114 = vector.shape_cast %113 : vector<16xf32> to vector<16x1xf32>
    %115 = tpu.reciprocal %114 {approx = true} : vector<16x1xf32> -> vector<16x1xf32>
    %116 = arith.mulf %114, %115 : vector<16x1xf32>
    %cst_39 = arith.constant 2.000000e+00 : f32
    %117 = vector.broadcast %cst_39 : f32 to vector<16x1xf32>
    %118 = arith.subf %117, %116 : vector<16x1xf32>
    %119 = arith.mulf %115, %118 : vector<16x1xf32>
    %cst_40 = arith.constant dense<0.000000e+00> : vector<16x8xf32>
    %120 = tpu.matmul %112, %104, %cst_40 {dimension_numbers = #tpu.dot_dimension_numbers<[1], [0], [0], [1], [0, 0, 1, 1], [], []>} : vector<16x16xf32>, vector<16x8xf32>, vector<16x8xf32> -> vector<16x8xf32>
    %121 = vector.broadcast %119 : vector<16x1xf32> to vector<16x8xf32>
    %122 = arith.mulf %120, %121 : vector<16x8xf32>
    %c0_41 = arith.constant 0 : index
    %c16 = arith.constant 16 : index
    %123 = vector.load %arg7[%c0_41, %c16] : memref<16x32xf32, #tpu.memory_space<vmem>>, vector<16x8xf32>
    tpu.vector_store %arg7[%c0_41, %c16], %122 {strides = array<i32>} : memref<16x32xf32, #tpu.memory_space<vmem>>, vector<16x8xf32>,
    %124 = vector.extract_strided_slice %14 {offsets = [0, 24], sizes = [16, 8], strides = [1, 1]} : vector<16x32xf32> to vector<16x8xf32>
    %125 = vector.extract_strided_slice %17 {offsets = [0, 24], sizes = [16, 8], strides = [1, 1]} : vector<16x32xf32> to vector<16x8xf32>
    %126 = vector.extract_strided_slice %22 {offsets = [0, 24], sizes = [16, 8], strides = [1, 1]} : vector<16x32xf32> to vector<16x8xf32>
    %cst_42 = arith.constant dense<0.000000e+00> : vector<16x16xf32>
    %127 = tpu.matmul %124, %125, %cst_42 {dimension_numbers = #tpu.dot_dimension_numbers<[1], [1], [0], [0], [0, 0, 1, 0], [], []>} : vector<16x8xf32>, vector<16x8xf32>, vector<16x16xf32> -> vector<16x16xf32>
    %cst_43 = arith.constant -1.000000e+30 : f32
    %128 = vector.broadcast %cst_43 : f32 to vector<16x16xf32>
    %129 = arith.select %57, %127, %128 : vector<16x16xi1>, vector<16x16xf32>
    %cst_44 = arith.constant dense<0xFF800000> : vector<16xf32>
    %130 = vector.multi_reduction <maximumf>, %129, %cst_44 [1] : vector<16x16xf32> to vector<16xf32>
    %131 = vector.shape_cast %130 : vector<16xf32> to vector<16x1xf32>
    %132 = vector.broadcast %131 : vector<16x1xf32> to vector<16x16xf32>
    %133 = arith.subf %129, %132 : vector<16x16xf32>
    %134 = math.exp %133 : vector<16x16xf32>
    %cst_45 = arith.constant dense<0.000000e+00> : vector<16xf32>
    %135 = vector.multi_reduction <add>, %134, %cst_45 [1] : vector<16x16xf32> to vector<16xf32>
    %136 = vector.shape_cast %135 : vector<16xf32> to vector<16x1xf32>
    %137 = tpu.reciprocal %136 {approx = true} : vector<16x1xf32> -> vector<16x1xf32>
    %138 = arith.mulf %136, %137 : vector<16x1xf32>
    %cst_46 = arith.constant 2.000000e+00 : f32
    %139 = vector.broadcast %cst_46 : f32 to vector<16x1xf32>
    %140 = arith.subf %139, %138 : vector<16x1xf32>
    %141 = arith.mulf %137, %140 : vector<16x1xf32>
    %cst_47 = arith.constant dense<0.000000e+00> : vector<16x8xf32>
    %142 = tpu.matmul %134, %126, %cst_47 {dimension_numbers = #tpu.dot_dimension_numbers<[1], [0], [0], [1], [0, 0, 1, 1], [], []>} : vector<16x16xf32>, vector<16x8xf32>, vector<16x8xf32> -> vector<16x8xf32>
    %143 = vector.broadcast %141 : vector<16x1xf32> to vector<16x8xf32>
    %144 = arith.mulf %142, %143 : vector<16x8xf32>
    %c0_48 = arith.constant 0 : index
    %c24 = arith.constant 24 : index
    %145 = vector.load %arg7[%c0_48, %c24] : memref<16x32xf32, #tpu.memory_space<vmem>>, vector<16x8xf32>
    tpu.vector_store %arg7[%c0_48, %c24], %144 {strides = array<i32>} : memref<16x32xf32, #tpu.memory_space<vmem>>, vector<16x8xf32>,
    %c0_49 = arith.constant 0 : index
    %c0_50 = arith.constant 0 : index
    %146 = vector.load %arg7[%c0_49, %c0_50] : memref<16x32xf32, #tpu.memory_space<vmem>>, vector<16x32xf32>
    %c1 = arith.constant 1 : index
    %c0_51 = arith.constant 0 : index
    %c0_52 = arith.constant 0 : index
    %147 = vector.load %arg4[%c1, %c0_51, %c0_52] : memref<2x32x32xf32, #tpu.memory_space<vmem>>, vector<1x32x32xf32>
    %148 = vector.shape_cast %147 : vector<1x32x32xf32> to vector<32x32xf32>
    %cst_53 = arith.constant dense<0.000000e+00> : vector<16x32xf32>
    %149 = tpu.matmul %146, %148, %cst_53 {dimension_numbers = #tpu.dot_dimension_numbers<[1], [0], [0], [1], [0, 0, 1, 1], [], []>} : vector<16x32xf32>, vector<32x32xf32>, vector<16x32xf32> -> vector<16x32xf32>
    %150 = vector.broadcast %7 : vector<1x32xf32> to vector<16x32xf32>
    %151 = arith.addf %149, %150 : vector<16x32xf32>
    %152 = arith.addf %0, %151 : vector<16x32xf32>
    %cst_54 = arith.constant dense<0.000000e+00> : vector<16xf32>
    %153 = vector.multi_reduction <add>, %152, %cst_54 [1] : vector<16x32xf32> to vector<16xf32>
    %154 = vector.shape_cast %153 : vector<16xf32> to vector<16x1xf32>
    %cst_55 = arith.constant 3.200000e+01 : f32
    %155 = vector.broadcast %cst_55 : f32 to vector<16x1xf32>
    %156 = arith.divf %154, %155 : vector<16x1xf32>
    %157 = vector.broadcast %156 : vector<16x1xf32> to vector<16x32xf32>
    %158 = arith.subf %152, %157 : vector<16x32xf32>
    %159 = arith.mulf %158, %158 : vector<16x32xf32>
    %cst_56 = arith.constant dense<0.000000e+00> : vector<16xf32>
    %160 = vector.multi_reduction <add>, %159, %cst_56 [1] : vector<16x32xf32> to vector<16xf32>
    %161 = vector.shape_cast %160 : vector<16xf32> to vector<16x1xf32>
    %cst_57 = arith.constant 3.200000e+01 : f32
    %162 = vector.broadcast %cst_57 : f32 to vector<16x1xf32>
    %163 = arith.divf %161, %162 : vector<16x1xf32>
    %164 = vector.broadcast %156 : vector<16x1xf32> to vector<16x32xf32>
    %165 = arith.subf %152, %164 : vector<16x32xf32>
    %cst_58 = arith.constant 9.99999974E-6 : f32
    %166 = vector.broadcast %cst_58 : f32 to vector<16x1xf32>
    %167 = arith.addf %163, %166 : vector<16x1xf32>
    %168 = math.rsqrt %167 : vector<16x1xf32>
    %169 = vector.broadcast %168 : vector<16x1xf32> to vector<16x32xf32>
    %170 = arith.mulf %165, %169 : vector<16x32xf32>
    %171 = vector.broadcast %8 : vector<1x32xf32> to vector<16x32xf32>
    %172 = arith.mulf %170, %171 : vector<16x32xf32>
    %173 = vector.broadcast %9 : vector<1x32xf32> to vector<16x32xf32>
    %174 = arith.addf %172, %173 : vector<16x32xf32>
    %c0_59 = arith.constant 0 : index
    %c0_60 = arith.constant 0 : index
    %175 = vector.load %arg6[%c0_59, %c0_60] : memref<16x32xf32, #tpu.memory_space<vmem>>, vector<16x32xf32>
    tpu.vector_store %arg6[%c0_59, %c0_60], %174 {strides = array<i32>} : memref<16x32xf32, #tpu.memory_space<vmem>>, vector<16x32xf32>,
    return
  }
  func.func @transform_0(%arg0: i32) -> (i32, i32) {
    %c0_i32 = arith.constant 0 : i32
    %c0_i32_0 = arith.constant 0 : i32
    %c0_i32_1 = arith.constant 0 : i32
    return %c0_i32, %c0_i32_0 : i32, i32
  }
  func.func @transform_1(%arg0: i32) -> (i32, i32) {
    %c0_i32 = arith.constant 0 : i32
    %c0_i32_0 = arith.constant 0 : i32
    %c0_i32_1 = arith.constant 0 : i32
    return %c0_i32, %c0_i32_0 : i32, i32
  }
  func.func @transform_2(%arg0: i32) -> (i32, i32) {
    %c0_i32 = arith.constant 0 : i32
    %c0_i32_0 = arith.constant 0 : i32
    %c0_i32_1 = arith.constant 0 : i32
    return %c0_i32, %c0_i32_0 : i32, i32
  }
  func.func @transform_3(%arg0: i32) -> (i32, i32, i32) {
    %c0_i32 = arith.constant 0 : i32
    %c0_i32_0 = arith.constant 0 : i32
    %c0_i32_1 = arith.constant 0 : i32
    %c0_i32_2 = arith.constant 0 : i32
    return %c0_i32, %c0_i32_0, %c0_i32_1 : i32, i32, i32
  }
  func.func @transform_4(%arg0: i32) -> (i32, i32) {
    %c0_i32 = arith.constant 0 : i32
    %c0_i32_0 = arith.constant 0 : i32
    %c0_i32_1 = arith.constant 0 : i32
    return %c0_i32, %c0_i32_0 : i32, i32
  }
  func.func @transform_5(%arg0: i32) -> (i32, i32) {
    %c0_i32 = arith.constant 0 : i32
    %c0_i32_0 = arith.constant 0 : i32
    %c0_i32_1 = arith.constant 0 : i32
    return %c0_i32, %c0_i32_0 : i32, i32
  }
}

</mosaic_0001>

<llo_original>
// kernel: encoder_forward.1
$region0: #{encoder_forward.1}
  #allocation0 [shape = 'u32[]', space=smem, size = 0x4, offset = 0x4, fixed_abs, tag = 'smem constant byte address 0x4 - core index']
  #allocation1 [shape = 'u32[144,128]{1,0:T(1,128)}', space=vmem, size = 0x12000, scoped, tag = 'internal scratch']
  #allocation2 [shape = 'f32[16,32]{1,0:T(8,128)}', space=vmem, size = 0x2000, scoped, tag = 'scratch operand']
  %s0 = inlined_call_operand.hbm [shape: f32[16,32], index: 0, kind: input, shape index: {}]
  %s1 = inlined_call_operand.hbm [shape: f32[16,32], index: 1, kind: input, shape index: {}]
  %s2 = inlined_call_operand.hbm [shape: f32[32,64], index: 2, kind: input, shape index: {}]
  %s3 = inlined_call_operand.hbm [shape: f32[2,32,32], index: 3, kind: input, shape index: {}]
  %s4 = inlined_call_operand.hbm [shape: f32[6,32], index: 4, kind: input, shape index: {}]
  %s5 = inlined_call_operand.hbm [shape: f32[16,32], index: 5, kind: output, shape index: {}]
  %s6 = sld [smem:[#allocation0]]
  $region50: #{encoder_forward.1} parent=0
    _
  %s8 = ssub.s32 1, %s6
  %s9 = scalar_select 0, %s8, %s6
  $region1: #{encoder_forward.1} parent=0
    #allocation3 [shape = 'u8[8192]{0}', space=vmem, size = 0x2000, scoped, tag = 'input window, operand 0, single buffered']
    #allocation4 [shape = 's32[1]{0}', space=sflag, size = 0x4, scoped, tag = 'scoped memory for encoder_forward.1']
    #allocation5 [shape = 's32[1]{0}', space=sflag, size = 0x4, scoped, tag = 'scoped memory for encoder_forward.1']
    #allocation6 [shape = 'u8[8192]{0}', space=vmem, size = 0x2000, scoped, tag = 'input window, operand 1, single buffered']
    #allocation7 [shape = 's32[1]{0}', space=sflag, size = 0x4, scoped, tag = 'scoped memory for encoder_forward.1']
    #allocation8 [shape = 'u8[16384]{0}', space=vmem, size = 0x4000, scoped, tag = 'input window, operand 2, single buffered']
    #allocation9 [shape = 'u8[32768]{0}', space=vmem, size = 0x8000, scoped, tag = 'input window, operand 3, single buffered']
    #allocation10 [shape = 's32[1]{0}', space=sflag, size = 0x4, scoped, tag = 'scoped memory for encoder_forward.1']
    #allocation11 [shape = 'u8[4096]{0}', space=vmem, size = 0x1000, scoped, tag = 'input window, operand 4, single buffered']
    #allocation12 [shape = 'u8[8192]{0}', space=vmem, size = 0x2000, scoped, tag = 'output window, operand 0, single buffered']
    %10 = vsyncpa [#allocation4], 0
    %11 = vsyncpa [#allocation7], 0
    %12 = vsyncpa [#allocation10], 0
    %13 = vsyncpa [#allocation5], 0
    // Predicated region
    $region2: #{encoder_forward.1} parent=1 // pred_check
      _
    $region3: #{encoder_forward.1} parent=1 // pred_check_branch
      %15 = sbr.rel (0) target = $region5
    $region4: #{encoder_forward.1} parent=1 // pred_region
      %s17 = ssub.s32 256, 256
      %18 = vsyncadd [#allocation4], %s17
      %s19 = sshll.u32 [#allocation3], 4
      %s20 = int_to_ptr.vmem [resolvable:$true] %s19
      %25 = dma.hbm_to_vmem [thread:$0]  %s0, 256, %s20, [#allocation4], 128, 128, 8
    $region5: #{encoder_forward.1} parent=1 // pred_fallthru
      _
    // Predicated region
    $region6: #{encoder_forward.1} parent=1 // pred_check
      _
    $region7: #{encoder_forward.1} parent=1 // pred_check_branch
      %27 = sbr.rel (0) target = $region9
    $region8: #{encoder_forward.1} parent=1 // pred_region
      %s29 = ssub.s32 256, 256
      %30 = vsyncadd [#allocation7], %s29
      %s31 = sshll.u32 [#allocation6], 4
      %s32 = int_to_ptr.vmem [resolvable:$true] %s31
      %37 = dma.hbm_to_vmem [thread:$0]  %s1, 256, %s32, [#allocation7], 128, 128, 8
    $region9: #{encoder_forward.1} parent=1 // pred_fallthru
      _
    // Predicated region
    $region10: #{encoder_forward.1} parent=1 // pred_check
      _
    $region11: #{encoder_forward.1} parent=1 // pred_check_branch
      %39 = sbr.rel (0) target = $region13
    $region12: #{encoder_forward.1} parent=1 // pred_region
      %s41 = ssub.s32 512, 512
      %42 = vsyncadd [#allocation7], %s41
      %s43 = sshll.u32 [#allocation8], 4
      %s44 = int_to_ptr.vmem [resolvable:$true] %s43
      %49 = dma.hbm_to_vmem [thread:$0]  %s2, 512, %s44, [#allocation7], 128, 128, 8
    $region13: #{encoder_forward.1} parent=1 // pred_fallthru
      _
    // Predicated region
    $region14: #{encoder_forward.1} parent=1 // pred_check
      _
    $region15: #{encoder_forward.1} parent=1 // pred_check_branch
      %51 = sbr.rel (0) target = $region17
    $region16: #{encoder_forward.1} parent=1 // pred_region
      %s53 = ssub.s32 1024, 1024
      %54 = vsyncadd [#allocation10], %s53
      %s55 = sshll.u32 [#allocation9], 4
      %s56 = int_to_ptr.vmem [resolvable:$true] %s55
      %61 = dma.hbm_to_vmem [thread:$0]  %s3, 1024, %s56, [#allocation10], 128, 128, 8
    $region17: #{encoder_forward.1} parent=1 // pred_fallthru
      _
    // Predicated region
    $region18: #{encoder_forward.1} parent=1 // pred_check
      _
    $region19: #{encoder_forward.1} parent=1 // pred_check_branch
      %63 = sbr.rel (0) target = $region21
    $region20: #{encoder_forward.1} parent=1 // pred_region
      %s65 = ssub.s32 128, 128
      %66 = vsyncadd [#allocation10], %s65
      %s68 = sshll.u32 [#allocation11], 4
      %s69 = int_to_ptr.vmem [resolvable:$true] %s68
      %71 = dma.hbm_to_vmem [thread:$0]  %s4, 128, %s69, [#allocation10]
    $region21: #{encoder_forward.1} parent=1 // pred_fallthru
      _
    // Predicated region
    $region22: #{encoder_forward.1} parent=1 // pred_check
      _
    $region23: #{encoder_forward.1} parent=1 // pred_check_branch
      %73 = sbr.rel (0) target = $region25
    $region24: #{encoder_forward.1} parent=1 // pred_region
      %74 = dma.done [#allocation4], 256
    $region25: #{encoder_forward.1} parent=1 // pred_fallthru
      _
    // Predicated region
    $region26: #{encoder_forward.1} parent=1 // pred_check
      _
    $region27: #{encoder_forward.1} parent=1 // pred_check_branch
      %76 = sbr.rel (0) target = $region29
    $region28: #{encoder_forward.1} parent=1 // pred_region
      %77 = dma.done [#allocation7], 256
    $region29: #{encoder_forward.1} parent=1 // pred_fallthru
      _
    // Predicated region
    $region30: #{encoder_forward.1} parent=1 // pred_check
      _
    $region31: #{encoder_forward.1} parent=1 // pred_check_branch
      %79 = sbr.rel (0) target = $region33
    $region32: #{encoder_forward.1} parent=1 // pred_region
      %80 = dma.done [#allocation7], 512
    $region33: #{encoder_forward.1} parent=1 // pred_fallthru
      _
    // Predicated region
    $region34: #{encoder_forward.1} parent=1 // pred_check
      _
    $region35: #{encoder_forward.1} parent=1 // pred_check_branch
      %82 = sbr.rel (0) target = $region37
    $region36: #{encoder_forward.1} parent=1 // pred_region
      %83 = dma.done [#allocation10], 1024
    $region37: #{encoder_forward.1} parent=1 // pred_fallthru
      _
    // Predicated region
    $region38: #{encoder_forward.1} parent=1 // pred_check
      _
    $region39: #{encoder_forward.1} parent=1 // pred_check_branch
      %85 = sbr.rel (0) target = $region41
    $region40: #{encoder_forward.1} parent=1 // pred_region
      %86 = dma.done [#allocation10], 128
    $region41: #{encoder_forward.1} parent=1 // pred_fallthru
      _
    %v87 = vld [vmem:[#allocation3] sm:$0xff]
    %v88 = vld [vmem:[#allocation3 + $0x8] sm:$0xff]
    %v89 = vld [vmem:[#allocation6] sm:$0xff]
    %v90 = vld [vmem:[#allocation6 + $0x8] sm:$0xff]
    %v91 = vadd.f32 %v87, %v89
    %v92 = vadd.f32 %v88, %v90
    %v93 = vld [vmem:[#allocation11] sm:$0x3f]
    %v94 = vld [vmem:[#allocation8] sm:$0xff]
    %v95 = vld [vmem:[#allocation8 + $0x8] sm:$0xff]
    %v96 = vld [vmem:[#allocation8 + $0x10] sm:$0xff]
    %v97 = vld [vmem:[#allocation8 + $0x18] sm:$0xff]
    %vm98 = vcmask 261120
    %v100 = vsel %vm98, %v91, 0
    %v103 = vsel %vm98, %v92, 0
    %105 = vmatprep.subr.mxu0 0.0
    %106 = vmatpush1.msra.mxu0 0.0
    %107 = vmatprep.subr.mxu0 0.0
    %108 = vmatpush1.msra.mxu0 0.0
    %109 = vmatprep.subr.mxu0 0.0
    %110 = vmatpush1.msra.mxu0 0.0
    %111 = vmatprep.subr.mxu0 0.0
    %112 = vmatpush1.msra.mxu0 0.0
    %113 = vmatprep.subr.mxu0 0.0
    %114 = vmatpush1.msra.mxu0 0.0
    %115 = vmatprep.subr.mxu0 0.0
    %116 = vmatpush1.msra.mxu0 0.0
    %117 = vmatprep.subr.mxu0 0.0
    %118 = vmatpush1.msra.mxu0 0.0
    %119 = vmatprep.subr.mxu0 0.0
    %120 = vmatpush1.msra.mxu0 0.0
    %121 = vmatprep.subr.mxu0 0.0
    %122 = vmatpush1.msra.mxu0 0.0
    %123 = vmatprep.subr.mxu0 0.0
    %124 = vmatpush1.msra.mxu0 0.0
    %125 = vmatprep.subr.mxu0 0.0
    %126 = vmatpush1.msra.mxu0 0.0
    %127 = vmatprep.subr.mxu0 0.0
    %128 = vmatpush1.msra.mxu0 0.0
    %129 = vmatprep.subr.mxu0 0.0
    %130 = vmatpush1.msra.mxu0 %v97
    %131 = vmatprep.subr.mxu0 0.0
    %132 = vmatpush1.msra.mxu0 %v96
    %133 = vmatprep.subr.mxu0 0.0
    %134 = vmatpush1.msra.mxu0 %v95
    %135 = vmatprep.subr.mxu0 0.0
    %136 = vmatpush1.msra.mxu0 %v94
    %137 = vmatprep.subr.mxu0 0.0
    %138 = vmatpush2.msra.mxu0 0.0
    %139 = vmatprep.subr.mxu0 0.0
    %140 = vmatpush2.msra.mxu0 0.0
    %141 = vmatprep.subr.mxu0 0.0
    %142 = vmatpush2.msra.mxu0 0.0
    %143 = vmatprep.subr.mxu0 0.0
    %144 = vmatpush2.msra.mxu0 0.0
    %145 = vmatprep.subr.mxu0 0.0
    %146 = vmatpush2.msra.mxu0 0.0
    %147 = vmatprep.subr.mxu0 0.0
    %148 = vmatpush2.msra.mxu0 0.0
    %149 = vmatprep.subr.mxu0 0.0
    %150 = vmatpush2.msra.mxu0 0.0
    %151 = vmatprep.subr.mxu0 0.0
    %152 = vmatpush2.msra.mxu0 0.0
    %153 = vmatprep.subr.mxu0 0.0
    %154 = vmatpush2.msra.mxu0 0.0
    %155 = vmatprep.subr.mxu0 0.0
    %156 = vmatpush2.msra.mxu0 0.0
    %157 = vmatprep.subr.mxu0 0.0
    %158 = vmatpush2.msra.mxu0 0.0
    %159 = vmatprep.subr.mxu0 0.0
    %160 = vmatpush2.msra.mxu0 0.0
    %161 = vmatprep.subr.mxu0 0.0
    %162 = vmatpush2.msra.mxu0 0.0
    %163 = vmatprep.subr.mxu0 0.0
    %164 = vmatpush2.msra.mxu0 0.0
    %165 = vmatprep.subr.mxu0 0.0
    %166 = vmatpush2.msra.mxu0 0.0
    %167 = vmatprep.subr.mxu0 0.0
    %168 = vmatpush2.msra.mxu0 0.0
    %169 = vmatprep.mubr.f32.mxu0 0.0
    %170 = vmatmul.mubr.f32.gmra.mxu0 %v100
    %v171 = vpop.f32.mrf.mxu0
    %v172 = vadd.f32 0.0, %v171
    %v173 = vpop.f32.mrf.mxu0
    %174 = vmatprep.mubr.f32.mxu0 0.0
    %175 = vmatmul.mubr.f32.gmra.mxu0 %v103
    %v176 = vpop.f32.mrf.mxu0
    %v177 = vadd.f32 0.0, %v176
    %v178 = vpop.f32.mrf.mxu0
    %179 = vdwg.mxu0
    %v180 = vlaneseq
    %v181 = vshrl.u32 %v180, 7
    %v182 = vsub.s32 0, %v181
    %v183 = vrot.slane %v93, %v182
    %v184 = vadd.f32 %v172, %v183
    %v185 = vadd.f32 %v177, %v183
    %v186 = vlaneseq
    %v187 = vshrl.u32 %v186, 7
    %v188 = vsub.s32 1, %v187
    %v189 = vrot.slane %v93, %v188
    %191 = vrot.lane.b32.xlu0 %v189, 32
    %v192 = vpop.permute.xlu0 %191
    %v194 = vadd.f32 %v172, %v192
    %v195 = vadd.f32 %v177, %v192
    %v196 = vld [vmem:[#allocation9] sm:$0xff]
    %v197 = vld [vmem:[#allocation9 + $0x8] sm:$0xff]
    %v198 = vld [vmem:[#allocation9 + $0x10] sm:$0xff]
    %v199 = vld [vmem:[#allocation9 + $0x18] sm:$0xff]
    %v200 = vlaneseq
    %v201 = vshrl.u32 %v200, 7
    %v202 = vsub.s32 2, %v201
    %v203 = vrot.slane %v93, %v202
    %v205 = vsel %vm98, %v87, 0
    %v208 = vsel %vm98, %v88, 0
    %210 = vmatprep.subr.mxu0 0.0
    %211 = vmatpush1.msra.mxu0 0.0
    %212 = vmatprep.subr.mxu0 0.0
    %213 = vmatpush1.msra.mxu0 0.0
    %214 = vmatprep.subr.mxu0 0.0
    %215 = vmatpush1.msra.mxu0 0.0
    %216 = vmatprep.subr.mxu0 0.0
    %217 = vmatpush1.msra.mxu0 0.0
    %218 = vmatprep.subr.mxu0 0.0
    %219 = vmatpush1.msra.mxu0 0.0
    %220 = vmatprep.subr.mxu0 0.0
    %221 = vmatpush1.msra.mxu0 0.0
    %222 = vmatprep.subr.mxu0 0.0
    %223 = vmatpush1.msra.mxu0 0.0
    %224 = vmatprep.subr.mxu0 0.0
    %225 = vmatpush1.msra.mxu0 0.0
    %226 = vmatprep.subr.mxu0 0.0
    %227 = vmatpush1.msra.mxu0 0.0
    %228 = vmatprep.subr.mxu0 0.0
    %229 = vmatpush1.msra.mxu0 0.0
    %230 = vmatprep.subr.mxu0 0.0
    %231 = vmatpush1.msra.mxu0 0.0
    %232 = vmatprep.subr.mxu0 0.0
    %233 = vmatpush1.msra.mxu0 0.0
    %234 = vmatprep.subr.mxu0 0.0
    %235 = vmatpush1.msra.mxu0 %v199
    %236 = vmatprep.subr.mxu0 0.0
    %237 = vmatpush1.msra.mxu0 %v198
    %238 = vmatprep.subr.mxu0 0.0
    %239 = vmatpush1.msra.mxu0 %v197
    %240 = vmatprep.subr.mxu0 0.0
    %241 = vmatpush1.msra.mxu0 %v196
    %242 = vmatprep.subr.mxu0 0.0
    %243 = vmatpush2.msra.mxu0 0.0
    %244 = vmatprep.subr.mxu0 0.0
    %245 = vmatpush2.msra.mxu0 0.0
    %246 = vmatprep.subr.mxu0 0.0
    %247 = vmatpush2.msra.mxu0 0.0
    %248 = vmatprep.subr.mxu0 0.0
    %249 = vmatpush2.msra.mxu0 0.0
    %250 = vmatprep.subr.mxu0 0.0
    %251 = vmatpush2.msra.mxu0 0.0
    %252 = vmatprep.subr.mxu0 0.0
    %253 = vmatpush2.msra.mxu0 0.0
    %254 = vmatprep.subr.mxu0 0.0
    %255 = vmatpush2.msra.mxu0 0.0
    %256 = vmatprep.subr.mxu0 0.0
    %257 = vmatpush2.msra.mxu0 0.0
    %258 = vmatprep.subr.mxu0 0.0
    %259 = vmatpush2.msra.mxu0 0.0
    %260 = vmatprep.subr.mxu0 0.0
    %261 = vmatpush2.msra.mxu0 0.0
    %262 = vmatprep.subr.mxu0 0.0
    %263 = vmatpush2.msra.mxu0 0.0
    %264 = vmatprep.subr.mxu0 0.0
    %265 = vmatpush2.msra.mxu0 0.0
    %266 = vmatprep.subr.mxu0 0.0
    %267 = vmatpush2.msra.mxu0 0.0
    %268 = vmatprep.subr.mxu0 0.0
    %269 = vmatpush2.msra.mxu0 0.0
    %270 = vmatprep.subr.mxu0 0.0
    %271 = vmatpush2.msra.mxu0 0.0
    %272 = vmatprep.subr.mxu0 0.0
    %273 = vmatpush2.msra.mxu0 0.0
    %274 = vmatprep.mubr.f32.mxu0 0.0
    %275 = vmatmul.mubr.f32.gmra.mxu0 %v205
    %v276 = vpop.f32.mrf.mxu0
    %v277 = vadd.f32 %v203, %v276
    %v278 = vpop.f32.mrf.mxu0
    %279 = vmatprep.mubr.f32.mxu0 0.0
    %280 = vmatmul.mubr.f32.gmra.mxu0 %v208
    %v281 = vpop.f32.mrf.mxu0
    %v282 = vadd.f32 %v203, %v281
    %v283 = vpop.f32.mrf.mxu0
    %284 = vdwg.mxu0
    %v285 = vlaneseq
    %v286 = vshrl.u32 %v285, 7
    %v287 = vadd.s32 %v286, 8
    %vm288 = vcmp.lt.s32.totalorder %v286, 0
    %v289 = vsub.s32 0, %v286
    %v290 = vsel %vm288, %v289, %v286
    %v291 = vshrl.u32 %v290, 1
    %v292 = vand.u32 %v290, 1
    %v293 = vsub.s32 0, %v292
    %v294 = vsel %vm288, %v293, %v292
    %vm295 = vcmp.lt.s32.totalorder %v287, 0
    %v296 = vsub.s32 0, %v287
    %v297 = vsel %vm295, %v296, %v287
    %v298 = vshrl.u32 %v297, 1
    %v299 = vand.u32 %v297, 1
    %v300 = vsub.s32 0, %v299
    %v301 = vsel %vm295, %v300, %v299
    %vm302 = vcmp.ne.s32.totalorder %v294, 0
    %vm303 = vcmp.ne.s32.totalorder %v301, 0
    %vm304 = vcmp.lt.s32.totalorder %v294, 0
    %vm305 = vcmp.lt.s32.totalorder %v301, 0
    %vm306 = vmand %vm304, %vm302
    %vm307 = vmand %vm305, %vm303
    %v308 = vadd.s32 %v294, 2
    %v309 = vadd.s32 %v301, 2
    %v310 = vsel %vm306, %v308, %v294
    %v311 = vsel %vm307, %v309, %v301
    %v312 = vlaneseq
    %v313 = vand.u32 %v312, 127
    %vm314 = vcmp.lt.s32.totalorder %v313, 0
    %v315 = vsub.s32 0, %v313
    %v316 = vsel %vm314, %v315, %v313
    %v317 = vshrl.u32 %v316, 1
    %v318 = vand.u32 %v316, 1
    %v319 = vsub.s32 0, %v318
    %v320 = vsel %vm314, %v319, %v318
    %vm321 = vcmp.ne.s32.totalorder %v320, 0
    %vm322 = vcmp.lt.s32.totalorder %v320, 0
    %vm323 = vmand %vm322, %vm321
    %v324 = vadd.s32 %v320, 2
    %v325 = vsel %vm323, %v324, %v320
    %vm326 = vcmp.eq.s32.totalorder %v310, %v325
    %vm327 = vcmp.eq.s32.totalorder %v311, %v325
    %330 = vrot.lane.b32.xlu0 %v194, 96
    %v331 = vpop.permute.xlu0 %330
    %332 = vrot.lane.b32.xlu0 %v195, 96
    %v333 = vpop.permute.xlu0 %332
    %vm334 = vcmask 64512
    %v336 = vsel %vm334, %v184, 0
    %v339 = vsel %vm334, %v185, 0
    %v341 = vsel %vm334, %v331, 0
    %v343 = vsel %vm334, %v333, 0
    %345 = vmatprep.subr.mxu0 0.0
    %346 = vmatpush1.xpose.msra.mxu0 0.0
    %347 = vmatprep.subr.mxu0 0.0
    %348 = vmatpush1.xpose.msra.mxu0 0.0
    %349 = vmatprep.subr.mxu0 0.0
    %350 = vmatpush1.xpose.msra.mxu0 0.0
    %351 = vmatprep.subr.mxu0 0.0
    %352 = vmatpush1.xpose.msra.mxu0 0.0
    %353 = vmatprep.subr.mxu0 0.0
    %354 = vmatpush1.xpose.msra.mxu0 0.0
    %355 = vmatprep.subr.mxu0 0.0
    %356 = vmatpush1.xpose.msra.mxu0 0.0
    %357 = vmatprep.subr.mxu0 0.0
    %358 = vmatpush1.xpose.msra.mxu0 0.0
    %359 = vmatprep.subr.mxu0 0.0
    %360 = vmatpush1.xpose.msra.mxu0 0.0
    %361 = vmatprep.subr.mxu0 0.0
    %362 = vmatpush1.xpose.msra.mxu0 0.0
    %363 = vmatprep.subr.mxu0 0.0
    %364 = vmatpush1.xpose.msra.mxu0 0.0
    %365 = vmatprep.subr.mxu0 0.0
    %366 = vmatpush1.xpose.msra.mxu0 0.0
    %367 = vmatprep.subr.mxu0 0.0
    %368 = vmatpush1.xpose.msra.mxu0 0.0
    %369 = vmatprep.subr.mxu0 0.0
    %370 = vmatpush1.xpose.msra.mxu0 0.0
    %371 = vmatprep.subr.mxu0 0.0
    %372 = vmatpush1.xpose.msra.mxu0 0.0
    %373 = vmatprep.subr.mxu0 0.0
    %374 = vmatpush1.xpose.msra.mxu0 %v343
    %375 = vmatprep.subr.mxu0 0.0
    %376 = vmatpush1.xpose.msra.mxu0 %v341
    %377 = vmatprep.subr.mxu0 0.0
    %378 = vmatpush2.xpose.msra.mxu0 0.0
    %379 = vmatprep.subr.mxu0 0.0
    %380 = vmatpush2.xpose.msra.mxu0 0.0
    %381 = vmatprep.subr.mxu0 0.0
    %382 = vmatpush2.xpose.msra.mxu0 0.0
    %383 = vmatprep.subr.mxu0 0.0
    %384 = vmatpush2.xpose.msra.mxu0 0.0
    %385 = vmatprep.subr.mxu0 0.0
    %386 = vmatpush2.xpose.msra.mxu0 0.0
    %387 = vmatprep.subr.mxu0 0.0
    %388 = vmatpush2.xpose.msra.mxu0 0.0
    %389 = vmatprep.subr.mxu0 0.0
    %390 = vmatpush2.xpose.msra.mxu0 0.0
    %391 = vmatprep.subr.mxu0 0.0
    %392 = vmatpush2.xpose.msra.mxu0 0.0
    %393 = vmatprep.subr.mxu0 0.0
    %394 = vmatpush2.xpose.msra.mxu0 0.0
    %395 = vmatprep.subr.mxu0 0.0
    %396 = vmatpush2.xpose.msra.mxu0 0.0
    %397 = vmatprep.subr.mxu0 0.0
    %398 = vmatpush2.xpose.msra.mxu0 0.0
    %399 = vmatprep.subr.mxu0 0.0
    %400 = vmatpush2.xpose.msra.mxu0 0.0
    %401 = vmatprep.subr.mxu0 0.0
    %402 = vmatpush2.xpose.msra.mxu0 0.0
    %403 = vmatprep.subr.mxu0 0.0
    %404 = vmatpush2.xpose.msra.mxu0 0.0
    %405 = vmatprep.subr.mxu0 0.0
    %406 = vmatpush2.xpose.msra.mxu0 0.0
    %407 = vmatprep.subr.mxu0 0.0
    %408 = vmatpush2.xpose.msra.mxu0 0.0
    %409 = vmatprep.mubr.f32.mxu0 0.0
    %410 = vmatmul.mubr.f32.gmra.mxu0 %v336
    %v411 = vpop.f32.mrf.mxu0
    %v412 = vadd.f32 0.0, %v411
    %v413 = vpop.f32.mrf.mxu0
    %414 = vmatprep.mubr.f32.mxu0 0.0
    %415 = vmatmul.mubr.f32.gmra.mxu0 %v339
    %v416 = vpop.f32.mrf.mxu0
    %v417 = vadd.f32 0.0, %v416
    %v418 = vpop.f32.mrf.mxu0
    %419 = vdwg.mxu0
    %v420 = vsel %vm326, %v412, -1e+30
    %v421 = vsel %vm327, %v417, -1e+30
    %vm422 = vcmask 130048
    %v423 = vsel %vm422, %v420, -inf
    %424 = vmax.xlane.f32.xlu0 %v423
    %v425 = vpop.xlane.xlu0 %424
    %v426 = vsel %vm422, %v421, -inf
    %427 = vmax.xlane.f32.xlu0 %v426
    %v428 = vpop.xlane.xlu0 %427
    %v429 = vsub.f32 %v420, %v425
    %v430 = vsub.f32 %v421, %v428
    %v431 = vmul.f32 %v429, 1.442695
    %v432 = vpow.pop %v431
    %v433 = vmul.f32 %v430, 1.442695
    %v434 = vpow.pop %v433
    %v435 = vsel %vm422, %v432, 0.0
    %436 = vadd.xlane.f32.xlu0 %v435
    %v437 = vpop.xlane.xlu0 %436
    %v438 = vsel %vm422, %v434, 0.0
    %439 = vadd.xlane.f32.xlu0 %v438
    %v440 = vpop.xlane.xlu0 %439
    %v441 = vrcp.pop %v437
    %v442 = vrcp.pop %v440
    %v443 = vmul.f32 %v437, %v441
    %v444 = vmul.f32 %v440, %v442
    %v445 = vsub.f32 2.0, %v443
    %v446 = vsub.f32 2.0, %v444
    %v447 = vmul.f32 %v441, %v445
    %v448 = vmul.f32 %v442, %v446
    %v450 = vsel %vm422, %v432, 0
    %v453 = vsel %vm422, %v434, 0
    %455 = vmatprep.subr.mxu0 0.0
    %456 = vmatpush1.msra.mxu0 0.0
    %457 = vmatprep.subr.mxu0 0.0
    %458 = vmatpush1.msra.mxu0 0.0
    %459 = vmatprep.subr.mxu0 0.0
    %460 = vmatpush1.msra.mxu0 0.0
    %461 = vmatprep.subr.mxu0 0.0
    %462 = vmatpush1.msra.mxu0 0.0
    %463 = vmatprep.subr.mxu0 0.0
    %464 = vmatpush1.msra.mxu0 0.0
    %465 = vmatprep.subr.mxu0 0.0
    %466 = vmatpush1.msra.mxu0 0.0
    %467 = vmatprep.subr.mxu0 0.0
    %468 = vmatpush1.msra.mxu0 0.0
    %469 = vmatprep.subr.mxu0 0.0
    %470 = vmatpush1.msra.mxu0 0.0
    %471 = vmatprep.subr.mxu0 0.0
    %472 = vmatpush1.msra.mxu0 0.0
    %473 = vmatprep.subr.mxu0 0.0
    %474 = vmatpush1.msra.mxu0 0.0
    %475 = vmatprep.subr.mxu0 0.0
    %476 = vmatpush1.msra.mxu0 0.0
    %477 = vmatprep.subr.mxu0 0.0
    %478 = vmatpush1.msra.mxu0 0.0
    %479 = vmatprep.subr.mxu0 0.0
    %480 = vmatpush1.msra.mxu0 0.0
    %481 = vmatprep.subr.mxu0 0.0
    %482 = vmatpush1.msra.mxu0 0.0
    %483 = vmatprep.subr.mxu0 0.0
    %484 = vmatpush1.msra.mxu0 %v282
    %485 = vmatprep.subr.mxu0 0.0
    %486 = vmatpush1.msra.mxu0 %v277
    %487 = vmatprep.subr.mxu0 0.0
    %488 = vmatpush2.msra.mxu0 0.0
    %489 = vmatprep.subr.mxu0 0.0
    %490 = vmatpush2.msra.mxu0 0.0
    %491 = vmatprep.subr.mxu0 0.0
    %492 = vmatpush2.msra.mxu0 0.0
    %493 = vmatprep.subr.mxu0 0.0
    %494 = vmatpush2.msra.mxu0 0.0
    %495 = vmatprep.subr.mxu0 0.0
    %496 = vmatpush2.msra.mxu0 0.0
    %497 = vmatprep.subr.mxu0 0.0
    %498 = vmatpush2.msra.mxu0 0.0
    %499 = vmatprep.subr.mxu0 0.0
    %500 = vmatpush2.msra.mxu0 0.0
    %501 = vmatprep.subr.mxu0 0.0
    %502 = vmatpush2.msra.mxu0 0.0
    %503 = vmatprep.subr.mxu0 0.0
    %504 = vmatpush2.msra.mxu0 0.0
    %505 = vmatprep.subr.mxu0 0.0
    %506 = vmatpush2.msra.mxu0 0.0
    %507 = vmatprep.subr.mxu0 0.0
    %508 = vmatpush2.msra.mxu0 0.0
    %509 = vmatprep.subr.mxu0 0.0
    %510 = vmatpush2.msra.mxu0 0.0
    %511 = vmatprep.subr.mxu0 0.0
    %512 = vmatpush2.msra.mxu0 0.0
    %513 = vmatprep.subr.mxu0 0.0
    %514 = vmatpush2.msra.mxu0 0.0
    %515 = vmatprep.subr.mxu0 0.0
    %516 = vmatpush2.msra.mxu0 0.0
    %517 = vmatprep.subr.mxu0 0.0
    %518 = vmatpush2.msra.mxu0 0.0
    %519 = vmatprep.mubr.f32.mxu0 0.0
    %520 = vmatmul.mubr.f32.gmra.mxu0 %v450
    %v521 = vpop.f32.mrf.mxu0
    %v522 = vadd.f32 0.0, %v521
    %v523 = vpop.f32.mrf.mxu0
    %524 = vmatprep.mubr.f32.mxu0 0.0
    %525 = vmatmul.mubr.f32.gmra.mxu0 %v453
    %v526 = vpop.f32.mrf.mxu0
    %v527 = vadd.f32 0.0, %v526
    %v528 = vpop.f32.mrf.mxu0
    %529 = vdwg.mxu0
    %v530 = vmul.f32 %v522, %v447
    %v531 = vmul.f32 %v527, %v448
    %532 = vst.msk [vmem:[#allocation2] sm:$0xff] %vm334, %v530
    %533 = vst.msk [vmem:[#allocation2 + $0x8] sm:$0xff] %vm334, %v531
    %534 = vrot.lane.b32.xlu0 %v184, 120
    %v535 = vpop.permute.xlu0 %534
    %536 = vrot.lane.b32.xlu0 %v185, 120
    %v537 = vpop.permute.xlu0 %536
    %538 = vrot.lane.b32.xlu0 %v194, 88
    %v539 = vpop.permute.xlu0 %538
    %540 = vrot.lane.b32.xlu0 %v195, 88
    %v541 = vpop.permute.xlu0 %540
    %v542 = vsel %vm334, %v535, 0
    %v544 = vsel %vm334, %v537, 0
    %v546 = vsel %vm334, %v539, 0
    %v548 = vsel %vm334, %v541, 0
    %550 = vmatprep.subr.mxu0 0.0
    %551 = vmatpush1.xpose.msra.mxu0 0.0
    %552 = vmatprep.subr.mxu0 0.0
    %553 = vmatpush1.xpose.msra.mxu0 0.0
    %554 = vmatprep.subr.mxu0 0.0
    %555 = vmatpush1.xpose.msra.mxu0 0.0
    %556 = vmatprep.subr.mxu0 0.0
    %557 = vmatpush1.xpose.msra.mxu0 0.0
    %558 = vmatprep.subr.mxu0 0.0
    %559 = vmatpush1.xpose.msra.mxu0 0.0
    %560 = vmatprep.subr.mxu0 0.0
    %561 = vmatpush1.xpose.msra.mxu0 0.0
    %562 = vmatprep.subr.mxu0 0.0
    %563 = vmatpush1.xpose.msra.mxu0 0.0
    %564 = vmatprep.subr.mxu0 0.0
    %565 = vmatpush1.xpose.msra.mxu0 0.0
    %566 = vmatprep.subr.mxu0 0.0
    %567 = vmatpush1.xpose.msra.mxu0 0.0
    %568 = vmatprep.subr.mxu0 0.0
    %569 = vmatpush1.xpose.msra.mxu0 0.0
    %570 = vmatprep.subr.mxu0 0.0
    %571 = vmatpush1.xpose.msra.mxu0 0.0
    %572 = vmatprep.subr.mxu0 0.0
    %573 = vmatpush1.xpose.msra.mxu0 0.0
    %574 = vmatprep.subr.mxu0 0.0
    %575 = vmatpush1.xpose.msra.mxu0 0.0
    %576 = vmatprep.subr.mxu0 0.0
    %577 = vmatpush1.xpose.msra.mxu0 0.0
    %578 = vmatprep.subr.mxu0 0.0
    %579 = vmatpush1.xpose.msra.mxu0 %v548
    %580 = vmatprep.subr.mxu0 0.0
    %581 = vmatpush1.xpose.msra.mxu0 %v546
    %582 = vmatprep.subr.mxu0 0.0
    %583 = vmatpush2.xpose.msra.mxu0 0.0
    %584 = vmatprep.subr.mxu0 0.0
    %585 = vmatpush2.xpose.msra.mxu0 0.0
    %586 = vmatprep.subr.mxu0 0.0
    %587 = vmatpush2.xpose.msra.mxu0 0.0
    %588 = vmatprep.subr.mxu0 0.0
    %589 = vmatpush2.xpose.msra.mxu0 0.0
    %590 = vmatprep.subr.mxu0 0.0
    %591 = vmatpush2.xpose.msra.mxu0 0.0
    %592 = vmatprep.subr.mxu0 0.0
    %593 = vmatpush2.xpose.msra.mxu0 0.0
    %594 = vmatprep.subr.mxu0 0.0
    %595 = vmatpush2.xpose.msra.mxu0 0.0
    %596 = vmatprep.subr.mxu0 0.0
    %597 = vmatpush2.xpose.msra.mxu0 0.0
    %598 = vmatprep.subr.mxu0 0.0
    %599 = vmatpush2.xpose.msra.mxu0 0.0
    %600 = vmatprep.subr.mxu0 0.0
    %601 = vmatpush2.xpose.msra.mxu0 0.0
    %602 = vmatprep.subr.mxu0 0.0
    %603 = vmatpush2.xpose.msra.mxu0 0.0
    %604 = vmatprep.subr.mxu0 0.0
    %605 = vmatpush2.xpose.msra.mxu0 0.0
    %606 = vmatprep.subr.mxu0 0.0
    %607 = vmatpush2.xpose.msra.mxu0 0.0
    %608 = vmatprep.subr.mxu0 0.0
    %609 = vmatpush2.xpose.msra.mxu0 0.0
    %610 = vmatprep.subr.mxu0 0.0
    %611 = vmatpush2.xpose.msra.mxu0 0.0
    %612 = vmatprep.subr.mxu0 0.0
    %613 = vmatpush2.xpose.msra.mxu0 0.0
    %614 = vmatprep.mubr.f32.mxu0 0.0
    %615 = vmatmul.mubr.f32.gmra.mxu0 %v542
    %v616 = vpop.f32.mrf.mxu0
    %v617 = vadd.f32 0.0, %v616
    %v618 = vpop.f32.mrf.mxu0
    %619 = vmatprep.mubr.f32.mxu0 0.0
    %620 = vmatmul.mubr.f32.gmra.mxu0 %v544
    %v621 = vpop.f32.mrf.mxu0
    %v622 = vadd.f32 0.0, %v621
    %v623 = vpop.f32.mrf.mxu0
    %624 = vdwg.mxu0
    %v625 = vsel %vm326, %v617, -1e+30
    %v626 = vsel %vm327, %v622, -1e+30
    %v627 = vsel %vm422, %v625, -inf
    %628 = vmax.xlane.f32.xlu0 %v627
    %v629 = vpop.xlane.xlu0 %628
    %v630 = vsel %vm422, %v626, -inf
    %631 = vmax.xlane.f32.xlu0 %v630
    %v632 = vpop.xlane.xlu0 %631
    %v633 = vsub.f32 %v625, %v629
    %v634 = vsub.f32 %v626, %v632
    %v635 = vmul.f32 %v633, 1.442695
    %v636 = vpow.pop %v635
    %v637 = vmul.f32 %v634, 1.442695
    %v638 = vpow.pop %v637
    %v639 = vsel %vm422, %v636, 0.0
    %640 = vadd.xlane.f32.xlu0 %v639
    %v641 = vpop.xlane.xlu0 %640
    %v642 = vsel %vm422, %v638, 0.0
    %643 = vadd.xlane.f32.xlu0 %v642
    %v644 = vpop.xlane.xlu0 %643
    %v645 = vrcp.pop %v641
    %v646 = vrcp.pop %v644
    %v647 = vmul.f32 %v641, %v645
    %v648 = vmul.f32 %v644, %v646
    %v649 = vsub.f32 2.0, %v647
    %v650 = vsub.f32 2.0, %v648
    %v651 = vmul.f32 %v645, %v649
    %v652 = vmul.f32 %v646, %v650
    %655 = vrot.lane.b32.xlu0 %v277, 120
    %v656 = vpop.permute.xlu0 %655
    %657 = vrot.lane.b32.xlu0 %v282, 120
    %v658 = vpop.permute.xlu0 %657
    %v662 = vsel %vm422, %v636, 0
    %v665 = vsel %vm422, %v638, 0
    %667 = vmatprep.subr.mxu0 0.0
    %668 = vmatpush1.msra.mxu0 0.0
    %669 = vmatprep.subr.mxu0 0.0
    %670 = vmatpush1.msra.mxu0 0.0
    %671 = vmatprep.subr.mxu0 0.0
    %672 = vmatpush1.msra.mxu0 0.0
    %673 = vmatprep.subr.mxu0 0.0
    %674 = vmatpush1.msra.mxu0 0.0
    %675 = vmatprep.subr.mxu0 0.0
    %676 = vmatpush1.msra.mxu0 0.0
    %677 = vmatprep.subr.mxu0 0.0
    %678 = vmatpush1.msra.mxu0 0.0
    %679 = vmatprep.subr.mxu0 0.0
    %680 = vmatpush1.msra.mxu0 0.0
    %681 = vmatprep.subr.mxu0 0.0
    %682 = vmatpush1.msra.mxu0 0.0
    %683 = vmatprep.subr.mxu0 0.0
    %684 = vmatpush1.msra.mxu0 0.0
    %685 = vmatprep.subr.mxu0 0.0
    %686 = vmatpush1.msra.mxu0 0.0
    %687 = vmatprep.subr.mxu0 0.0
    %688 = vmatpush1.msra.mxu0 0.0
    %689 = vmatprep.subr.mxu0 0.0
    %690 = vmatpush1.msra.mxu0 0.0
    %691 = vmatprep.subr.mxu0 0.0
    %692 = vmatpush1.msra.mxu0 0.0
    %693 = vmatprep.subr.mxu0 0.0
    %694 = vmatpush1.msra.mxu0 0.0
    %695 = vmatprep.subr.mxu0 0.0
    %696 = vmatpush1.msra.mxu0 %v658
    %697 = vmatprep.subr.mxu0 0.0
    %698 = vmatpush1.msra.mxu0 %v656
    %699 = vmatprep.subr.mxu0 0.0
    %700 = vmatpush2.msra.mxu0 0.0
    %701 = vmatprep.subr.mxu0 0.0
    %702 = vmatpush2.msra.mxu0 0.0
    %703 = vmatprep.subr.mxu0 0.0
    %704 = vmatpush2.msra.mxu0 0.0
    %705 = vmatprep.subr.mxu0 0.0
    %706 = vmatpush2.msra.mxu0 0.0
    %707 = vmatprep.subr.mxu0 0.0
    %708 = vmatpush2.msra.mxu0 0.0
    %709 = vmatprep.subr.mxu0 0.0
    %710 = vmatpush2.msra.mxu0 0.0
    %711 = vmatprep.subr.mxu0 0.0
    %712 = vmatpush2.msra.mxu0 0.0
    %713 = vmatprep.subr.mxu0 0.0
    %714 = vmatpush2.msra.mxu0 0.0
    %715 = vmatprep.subr.mxu0 0.0
    %716 = vmatpush2.msra.mxu0 0.0
    %717 = vmatprep.subr.mxu0 0.0
    %718 = vmatpush2.msra.mxu0 0.0
    %719 = vmatprep.subr.mxu0 0.0
    %720 = vmatpush2.msra.mxu0 0.0
    %721 = vmatprep.subr.mxu0 0.0
    %722 = vmatpush2.msra.mxu0 0.0
    %723 = vmatprep.subr.mxu0 0.0
    %724 = vmatpush2.msra.mxu0 0.0
    %725 = vmatprep.subr.mxu0 0.0
    %726 = vmatpush2.msra.mxu0 0.0
    %727 = vmatprep.subr.mxu0 0.0
    %728 = vmatpush2.msra.mxu0 0.0
    %729 = vmatprep.subr.mxu0 0.0
    %730 = vmatpush2.msra.mxu0 0.0
    %731 = vmatprep.mubr.f32.mxu0 0.0
    %732 = vmatmul.mubr.f32.gmra.mxu0 %v662
    %v733 = vpop.f32.mrf.mxu0
    %v734 = vadd.f32 0.0, %v733
    %v735 = vpop.f32.mrf.mxu0
    %736 = vmatprep.mubr.f32.mxu0 0.0
    %737 = vmatmul.mubr.f32.gmra.mxu0 %v665
    %v738 = vpop.f32.mrf.mxu0
    %v739 = vadd.f32 0.0, %v738
    %v740 = vpop.f32.mrf.mxu0
    %741 = vdwg.mxu0
    %v742 = vmul.f32 %v734, %v651
    %v743 = vmul.f32 %v739, %v652
    %746 = vrot.lane.b32.xlu0 %v742, 8
    %v747 = vpop.permute.xlu0 %746
    %748 = vrot.lane.b32.xlu0 %v743, 8
    %v749 = vpop.permute.xlu0 %748
    %vm752 = vcmask 130112
    %753 = vst.msk [vmem:[#allocation2] sm:$0xff] %vm752, %v747
    %754 = vst.msk [vmem:[#allocation2 + $0x8] sm:$0xff] %vm752, %v749
    %755 = vrot.lane.b32.xlu0 %v184, 112
    %v756 = vpop.permute.xlu0 %755
    %757 = vrot.lane.b32.xlu0 %v185, 112
    %v758 = vpop.permute.xlu0 %757
    %759 = vrot.lane.b32.xlu0 %v194, 80
    %v760 = vpop.permute.xlu0 %759
    %761 = vrot.lane.b32.xlu0 %v195, 80
    %v762 = vpop.permute.xlu0 %761
    %v763 = vsel %vm334, %v756, 0
    %v765 = vsel %vm334, %v758, 0
    %v767 = vsel %vm334, %v760, 0
    %v769 = vsel %vm334, %v762, 0
    %771 = vmatprep.subr.mxu0 0.0
    %772 = vmatpush1.xpose.msra.mxu0 0.0
    %773 = vmatprep.subr.mxu0 0.0
    %774 = vmatpush1.xpose.msra.mxu0 0.0
    %775 = vmatprep.subr.mxu0 0.0
    %776 = vmatpush1.xpose.msra.mxu0 0.0
    %777 = vmatprep.subr.mxu0 0.0
    %778 = vmatpush1.xpose.msra.mxu0 0.0
    %779 = vmatprep.subr.mxu0 0.0
    %780 = vmatpush1.xpose.msra.mxu0 0.0
    %781 = vmatprep.subr.mxu0 0.0
    %782 = vmatpush1.xpose.msra.mxu0 0.0
    %783 = vmatprep.subr.mxu0 0.0
    %784 = vmatpush1.xpose.msra.mxu0 0.0
    %785 = vmatprep.subr.mxu0 0.0
    %786 = vmatpush1.xpose.msra.mxu0 0.0
    %787 = vmatprep.subr.mxu0 0.0
    %788 = vmatpush1.xpose.msra.mxu0 0.0
    %789 = vmatprep.subr.mxu0 0.0
    %790 = vmatpush1.xpose.msra.mxu0 0.0
    %791 = vmatprep.subr.mxu0 0.0
    %792 = vmatpush1.xpose.msra.mxu0 0.0
    %793 = vmatprep.subr.mxu0 0.0
    %794 = vmatpush1.xpose.msra.mxu0 0.0
    %795 = vmatprep.subr.mxu0 0.0
    %796 = vmatpush1.xpose.msra.mxu0 0.0
    %797 = vmatprep.subr.mxu0 0.0
    %798 = vmatpush1.xpose.msra.mxu0 0.0
    %799 = vmatprep.subr.mxu0 0.0
    %800 = vmatpush1.xpose.msra.mxu0 %v769
    %801 = vmatprep.subr.mxu0 0.0
    %802 = vmatpush1.xpose.msra.mxu0 %v767
    %803 = vmatprep.subr.mxu0 0.0
    %804 = vmatpush2.xpose.msra.mxu0 0.0
    %805 = vmatprep.subr.mxu0 0.0
    %806 = vmatpush2.xpose.msra.mxu0 0.0
    %807 = vmatprep.subr.mxu0 0.0
    %808 = vmatpush2.xpose.msra.mxu0 0.0
    %809 = vmatprep.subr.mxu0 0.0
    %810 = vmatpush2.xpose.msra.mxu0 0.0
    %811 = vmatprep.subr.mxu0 0.0
    %812 = vmatpush2.xpose.msra.mxu0 0.0
    %813 = vmatprep.subr.mxu0 0.0
    %814 = vmatpush2.xpose.msra.mxu0 0.0
    %815 = vmatprep.subr.mxu0 0.0
    %816 = vmatpush2.xpose.msra.mxu0 0.0
    %817 = vmatprep.subr.mxu0 0.0
    %818 = vmatpush2.xpose.msra.mxu0 0.0
    %819 = vmatprep.subr.mxu0 0.0
    %820 = vmatpush2.xpose.msra.mxu0 0.0
    %821 = vmatprep.subr.mxu0 0.0
    %822 = vmatpush2.xpose.msra.mxu0 0.0
    %823 = vmatprep.subr.mxu0 0.0
    %824 = vmatpush2.xpose.msra.mxu0 0.0
    %825 = vmatprep.subr.mxu0 0.0
    %826 = vmatpush2.xpose.msra.mxu0 0.0
    %827 = vmatprep.subr.mxu0 0.0
    %828 = vmatpush2.xpose.msra.mxu0 0.0
    %829 = vmatprep.subr.mxu0 0.0
    %830 = vmatpush2.xpose.msra.mxu0 0.0
    %831 = vmatprep.subr.mxu0 0.0
    %832 = vmatpush2.xpose.msra.mxu0 0.0
    %833 = vmatprep.subr.mxu0 0.0
    %834 = vmatpush2.xpose.msra.mxu0 0.0
    %835 = vmatprep.mubr.f32.mxu0 0.0
    %836 = vmatmul.mubr.f32.gmra.mxu0 %v763
    %v837 = vpop.f32.mrf.mxu0
    %v838 = vadd.f32 0.0, %v837
    %v839 = vpop.f32.mrf.mxu0
    %840 = vmatprep.mubr.f32.mxu0 0.0
    %841 = vmatmul.mubr.f32.gmra.mxu0 %v765
    %v842 = vpop.f32.mrf.mxu0
    %v843 = vadd.f32 0.0, %v842
    %v844 = vpop.f32.mrf.mxu0
    %845 = vdwg.mxu0
    %v846 = vsel %vm326, %v838, -1e+30
    %v847 = vsel %vm327, %v843, -1e+30
    %v848 = vsel %vm422, %v846, -inf
    %849 = vmax.xlane.f32.xlu0 %v848
    %v850 = vpop.xlane.xlu0 %849
    %v851 = vsel %vm422, %v847, -inf
    %852 = vmax.xlane.f32.xlu0 %v851
    %v853 = vpop.xlane.xlu0 %852
    %v854 = vsub.f32 %v846, %v850
    %v855 = vsub.f32 %v847, %v853
    %v856 = vmul.f32 %v854, 1.442695
    %v857 = vpow.pop %v856
    %v858 = vmul.f32 %v855, 1.442695
    %v859 = vpow.pop %v858
    %v860 = vsel %vm422, %v857, 0.0
    %861 = vadd.xlane.f32.xlu0 %v860
    %v862 = vpop.xlane.xlu0 %861
    %v863 = vsel %vm422, %v859, 0.0
    %864 = vadd.xlane.f32.xlu0 %v863
    %v865 = vpop.xlane.xlu0 %864
    %v866 = vrcp.pop %v862
    %v867 = vrcp.pop %v865
    %v868 = vmul.f32 %v862, %v866
    %v869 = vmul.f32 %v865, %v867
    %v870 = vsub.f32 2.0, %v868
    %v871 = vsub.f32 2.0, %v869
    %v872 = vmul.f32 %v866, %v870
    %v873 = vmul.f32 %v867, %v871
    %874 = vrot.lane.b32.xlu0 %v277, 112
    %v875 = vpop.permute.xlu0 %874
    %876 = vrot.lane.b32.xlu0 %v282, 112
    %v877 = vpop.permute.xlu0 %876
    %v881 = vsel %vm422, %v857, 0
    %v884 = vsel %vm422, %v859, 0
    %886 = vmatprep.subr.mxu0 0.0
    %887 = vmatpush1.msra.mxu0 0.0
    %888 = vmatprep.subr.mxu0 0.0
    %889 = vmatpush1.msra.mxu0 0.0
    %890 = vmatprep.subr.mxu0 0.0
    %891 = vmatpush1.msra.mxu0 0.0
    %892 = vmatprep.subr.mxu0 0.0
    %893 = vmatpush1.msra.mxu0 0.0
    %894 = vmatprep.subr.mxu0 0.0
    %895 = vmatpush1.msra.mxu0 0.0
    %896 = vmatprep.subr.mxu0 0.0
    %897 = vmatpush1.msra.mxu0 0.0
    %898 = vmatprep.subr.mxu0 0.0
    %899 = vmatpush1.msra.mxu0 0.0
    %900 = vmatprep.subr.mxu0 0.0
    %901 = vmatpush1.msra.mxu0 0.0
    %902 = vmatprep.subr.mxu0 0.0
    %903 = vmatpush1.msra.mxu0 0.0
    %904 = vmatprep.subr.mxu0 0.0
    %905 = vmatpush1.msra.mxu0 0.0
    %906 = vmatprep.subr.mxu0 0.0
    %907 = vmatpush1.msra.mxu0 0.0
    %908 = vmatprep.subr.mxu0 0.0
    %909 = vmatpush1.msra.mxu0 0.0
    %910 = vmatprep.subr.mxu0 0.0
    %911 = vmatpush1.msra.mxu0 0.0
    %912 = vmatprep.subr.mxu0 0.0
    %913 = vmatpush1.msra.mxu0 0.0
    %914 = vmatprep.subr.mxu0 0.0
    %915 = vmatpush1.msra.mxu0 %v877
    %916 = vmatprep.subr.mxu0 0.0
    %917 = vmatpush1.msra.mxu0 %v875
    %918 = vmatprep.subr.mxu0 0.0
    %919 = vmatpush2.msra.mxu0 0.0
    %920 = vmatprep.subr.mxu0 0.0
    %921 = vmatpush2.msra.mxu0 0.0
    %922 = vmatprep.subr.mxu0 0.0
    %923 = vmatpush2.msra.mxu0 0.0
    %924 = vmatprep.subr.mxu0 0.0
    %925 = vmatpush2.msra.mxu0 0.0
    %926 = vmatprep.subr.mxu0 0.0
    %927 = vmatpush2.msra.mxu0 0.0
    %928 = vmatprep.subr.mxu0 0.0
    %929 = vmatpush2.msra.mxu0 0.0
    %930 = vmatprep.subr.mxu0 0.0
    %931 = vmatpush2.msra.mxu0 0.0
    %932 = vmatprep.subr.mxu0 0.0
    %933 = vmatpush2.msra.mxu0 0.0
    %934 = vmatprep.subr.mxu0 0.0
    %935 = vmatpush2.msra.mxu0 0.0
    %936 = vmatprep.subr.mxu0 0.0
    %937 = vmatpush2.msra.mxu0 0.0
    %938 = vmatprep.subr.mxu0 0.0
    %939 = vmatpush2.msra.mxu0 0.0
    %940 = vmatprep.subr.mxu0 0.0
    %941 = vmatpush2.msra.mxu0 0.0
    %942 = vmatprep.subr.mxu0 0.0
    %943 = vmatpush2.msra.mxu0 0.0
    %944 = vmatprep.subr.mxu0 0.0
    %945 = vmatpush2.msra.mxu0 0.0
    %946 = vmatprep.subr.mxu0 0.0
    %947 = vmatpush2.msra.mxu0 0.0
    %948 = vmatprep.subr.mxu0 0.0
    %949 = vmatpush2.msra.mxu0 0.0
    %950 = vmatprep.mubr.f32.mxu0 0.0
    %951 = vmatmul.mubr.f32.gmra.mxu0 %v881
    %v952 = vpop.f32.mrf.mxu0
    %v953 = vadd.f32 0.0, %v952
    %v954 = vpop.f32.mrf.mxu0
    %955 = vmatprep.mubr.f32.mxu0 0.0
    %956 = vmatmul.mubr.f32.gmra.mxu0 %v884
    %v957 = vpop.f32.mrf.mxu0
    %v958 = vadd.f32 0.0, %v957
    %v959 = vpop.f32.mrf.mxu0
    %960 = vdwg.mxu0
    %v961 = vmul.f32 %v953, %v872
    %v962 = vmul.f32 %v958, %v873
    %965 = vrot.lane.b32.xlu0 %v961, 16
    %v966 = vpop.permute.xlu0 %965
    %967 = vrot.lane.b32.xlu0 %v962, 16
    %v968 = vpop.permute.xlu0 %967
    %vm971 = vcmask 195712
    %972 = vst.msk [vmem:[#allocation2] sm:$0xff] %vm971, %v966
    %973 = vst.msk [vmem:[#allocation2 + $0x8] sm:$0xff] %vm971, %v968
    %974 = vrot.lane.b32.xlu0 %v184, 104
    %v975 = vpop.permute.xlu0 %974
    %976 = vrot.lane.b32.xlu0 %v185, 104
    %v977 = vpop.permute.xlu0 %976
    %978 = vrot.lane.b32.xlu0 %v194, 72
    %v979 = vpop.permute.xlu0 %978
    %980 = vrot.lane.b32.xlu0 %v195, 72
    %v981 = vpop.permute.xlu0 %980
    %v982 = vsel %vm334, %v975, 0
    %v984 = vsel %vm334, %v977, 0
    %v986 = vsel %vm334, %v979, 0
    %v988 = vsel %vm334, %v981, 0
    %990 = vmatprep.subr.mxu0 0.0
    %991 = vmatpush1.xpose.msra.mxu0 0.0
    %992 = vmatprep.subr.mxu0 0.0
    %993 = vmatpush1.xpose.msra.mxu0 0.0
    %994 = vmatprep.subr.mxu0 0.0
    %995 = vmatpush1.xpose.msra.mxu0 0.0
    %996 = vmatprep.subr.mxu0 0.0
    %997 = vmatpush1.xpose.msra.mxu0 0.0
    %998 = vmatprep.subr.mxu0 0.0
    %999 = vmatpush1.xpose.msra.mxu0 0.0
    %1000 = vmatprep.subr.mxu0 0.0
    %1001 = vmatpush1.xpose.msra.mxu0 0.0
    %1002 = vmatprep.subr.mxu0 0.0
    %1003 = vmatpush1.xpose.msra.mxu0 0.0
    %1004 = vmatprep.subr.mxu0 0.0
    %1005 = vmatpush1.xpose.msra.mxu0 0.0
    %1006 = vmatprep.subr.mxu0 0.0
    %1007 = vmatpush1.xpose.msra.mxu0 0.0
    %1008 = vmatprep.subr.mxu0 0.0
    %1009 = vmatpush1.xpose.msra.mxu0 0.0
    %1010 = vmatprep.subr.mxu0 0.0
    %1011 = vmatpush1.xpose.msra.mxu0 0.0
    %1012 = vmatprep.subr.mxu0 0.0
    %1013 = vmatpush1.xpose.msra.mxu0 0.0
    %1014 = vmatprep.subr.mxu0 0.0
    %1015 = vmatpush1.xpose.msra.mxu0 0.0
    %1016 = vmatprep.subr.mxu0 0.0
    %1017 = vmatpush1.xpose.msra.mxu0 0.0
    %1018 = vmatprep.subr.mxu0 0.0
    %1019 = vmatpush1.xpose.msra.mxu0 %v988
    %1020 = vmatprep.subr.mxu0 0.0
    %1021 = vmatpush1.xpose.msra.mxu0 %v986
    %1022 = vmatprep.subr.mxu0 0.0
    %1023 = vmatpush2.xpose.msra.mxu0 0.0
    %1024 = vmatprep.subr.mxu0 0.0
    %1025 = vmatpush2.xpose.msra.mxu0 0.0
    %1026 = vmatprep.subr.mxu0 0.0
    %1027 = vmatpush2.xpose.msra.mxu0 0.0
    %1028 = vmatprep.subr.mxu0 0.0
    %1029 = vmatpush2.xpose.msra.mxu0 0.0
    %1030 = vmatprep.subr.mxu0 0.0
    %1031 = vmatpush2.xpose.msra.mxu0 0.0
    %1032 = vmatprep.subr.mxu0 0.0
    %1033 = vmatpush2.xpose.msra.mxu0 0.0
    %1034 = vmatprep.subr.mxu0 0.0
    %1035 = vmatpush2.xpose.msra.mxu0 0.0
    %1036 = vmatprep.subr.mxu0 0.0
    %1037 = vmatpush2.xpose.msra.mxu0 0.0
    %1038 = vmatprep.subr.mxu0 0.0
    %1039 = vmatpush2.xpose.msra.mxu0 0.0
    %1040 = vmatprep.subr.mxu0 0.0
    %1041 = vmatpush2.xpose.msra.mxu0 0.0
    %1042 = vmatprep.subr.mxu0 0.0
    %1043 = vmatpush2.xpose.msra.mxu0 0.0
    %1044 = vmatprep.subr.mxu0 0.0
    %1045 = vmatpush2.xpose.msra.mxu0 0.0
    %1046 = vmatprep.subr.mxu0 0.0
    %1047 = vmatpush2.xpose.msra.mxu0 0.0
    %1048 = vmatprep.subr.mxu0 0.0
    %1049 = vmatpush2.xpose.msra.mxu0 0.0
    %1050 = vmatprep.subr.mxu0 0.0
    %1051 = vmatpush2.xpose.msra.mxu0 0.0
    %1052 = vmatprep.subr.mxu0 0.0
    %1053 = vmatpush2.xpose.msra.mxu0 0.0
    %1054 = vmatprep.mubr.f32.mxu0 0.0
    %1055 = vmatmul.mubr.f32.gmra.mxu0 %v982
    %v1056 = vpop.f32.mrf.mxu0
    %v1057 = vadd.f32 0.0, %v1056
    %v1058 = vpop.f32.mrf.mxu0
    %1059 = vmatprep.mubr.f32.mxu0 0.0
    %1060 = vmatmul.mubr.f32.gmra.mxu0 %v984
    %v1061 = vpop.f32.mrf.mxu0
    %v1062 = vadd.f32 0.0, %v1061
    %v1063 = vpop.f32.mrf.mxu0
    %1064 = vdwg.mxu0
    %v1065 = vsel %vm326, %v1057, -1e+30
    %v1066 = vsel %vm327, %v1062, -1e+30
    %v1067 = vsel %vm422, %v1065, -inf
    %1068 = vmax.xlane.f32.xlu0 %v1067
    %v1069 = vpop.xlane.xlu0 %1068
    %v1070 = vsel %vm422, %v1066, -inf
    %1071 = vmax.xlane.f32.xlu0 %v1070
    %v1072 = vpop.xlane.xlu0 %1071
    %v1073 = vsub.f32 %v1065, %v1069
    %v1074 = vsub.f32 %v1066, %v1072
    %v1075 = vmul.f32 %v1073, 1.442695
    %v1076 = vpow.pop %v1075
    %v1077 = vmul.f32 %v1074, 1.442695
    %v1078 = vpow.pop %v1077
    %v1079 = vsel %vm422, %v1076, 0.0
    %1080 = vadd.xlane.f32.xlu0 %v1079
    %v1081 = vpop.xlane.xlu0 %1080
    %v1082 = vsel %vm422, %v1078, 0.0
    %1083 = vadd.xlane.f32.xlu0 %v1082
    %v1084 = vpop.xlane.xlu0 %1083
    %v1085 = vrcp.pop %v1081
    %v1086 = vrcp.pop %v1084
    %v1087 = vmul.f32 %v1081, %v1085
    %v1088 = vmul.f32 %v1084, %v1086
    %v1089 = vsub.f32 2.0, %v1087
    %v1090 = vsub.f32 2.0, %v1088
    %v1091 = vmul.f32 %v1085, %v1089
    %v1092 = vmul.f32 %v1086, %v1090
    %1093 = vrot.lane.b32.xlu0 %v277, 104
    %v1094 = vpop.permute.xlu0 %1093
    %1095 = vrot.lane.b32.xlu0 %v282, 104
    %v1096 = vpop.permute.xlu0 %1095
    %v1100 = vsel %vm422, %v1076, 0
    %v1103 = vsel %vm422, %v1078, 0
    %1105 = vmatprep.subr.mxu0 0.0
    %1106 = vmatpush1.msra.mxu0 0.0
    %1107 = vmatprep.subr.mxu0 0.0
    %1108 = vmatpush1.msra.mxu0 0.0
    %1109 = vmatprep.subr.mxu0 0.0
    %1110 = vmatpush1.msra.mxu0 0.0
    %1111 = vmatprep.subr.mxu0 0.0
    %1112 = vmatpush1.msra.mxu0 0.0
    %1113 = vmatprep.subr.mxu0 0.0
    %1114 = vmatpush1.msra.mxu0 0.0
    %1115 = vmatprep.subr.mxu0 0.0
    %1116 = vmatpush1.msra.mxu0 0.0
    %1117 = vmatprep.subr.mxu0 0.0
    %1118 = vmatpush1.msra.mxu0 0.0
    %1119 = vmatprep.subr.mxu0 0.0
    %1120 = vmatpush1.msra.mxu0 0.0
    %1121 = vmatprep.subr.mxu0 0.0
    %1122 = vmatpush1.msra.mxu0 0.0
    %1123 = vmatprep.subr.mxu0 0.0
    %1124 = vmatpush1.msra.mxu0 0.0
    %1125 = vmatprep.subr.mxu0 0.0
    %1126 = vmatpush1.msra.mxu0 0.0
    %1127 = vmatprep.subr.mxu0 0.0
    %1128 = vmatpush1.msra.mxu0 0.0
    %1129 = vmatprep.subr.mxu0 0.0
    %1130 = vmatpush1.msra.mxu0 0.0
    %1131 = vmatprep.subr.mxu0 0.0
    %1132 = vmatpush1.msra.mxu0 0.0
    %1133 = vmatprep.subr.mxu0 0.0
    %1134 = vmatpush1.msra.mxu0 %v1096
    %1135 = vmatprep.subr.mxu0 0.0
    %1136 = vmatpush1.msra.mxu0 %v1094
    %1137 = vmatprep.subr.mxu0 0.0
    %1138 = vmatpush2.msra.mxu0 0.0
    %1139 = vmatprep.subr.mxu0 0.0
    %1140 = vmatpush2.msra.mxu0 0.0
    %1141 = vmatprep.subr.mxu0 0.0
    %1142 = vmatpush2.msra.mxu0 0.0
    %1143 = vmatprep.subr.mxu0 0.0
    %1144 = vmatpush2.msra.mxu0 0.0
    %1145 = vmatprep.subr.mxu0 0.0
    %1146 = vmatpush2.msra.mxu0 0.0
    %1147 = vmatprep.subr.mxu0 0.0
    %1148 = vmatpush2.msra.mxu0 0.0
    %1149 = vmatprep.subr.mxu0 0.0
    %1150 = vmatpush2.msra.mxu0 0.0
    %1151 = vmatprep.subr.mxu0 0.0
    %1152 = vmatpush2.msra.mxu0 0.0
    %1153 = vmatprep.subr.mxu0 0.0
    %1154 = vmatpush2.msra.mxu0 0.0
    %1155 = vmatprep.subr.mxu0 0.0
    %1156 = vmatpush2.msra.mxu0 0.0
    %1157 = vmatprep.subr.mxu0 0.0
    %1158 = vmatpush2.msra.mxu0 0.0
    %1159 = vmatprep.subr.mxu0 0.0
    %1160 = vmatpush2.msra.mxu0 0.0
    %1161 = vmatprep.subr.mxu0 0.0
    %1162 = vmatpush2.msra.mxu0 0.0
    %1163 = vmatprep.subr.mxu0 0.0
    %1164 = vmatpush2.msra.mxu0 0.0
    %1165 = vmatprep.subr.mxu0 0.0
    %1166 = vmatpush2.msra.mxu0 0.0
    %1167 = vmatprep.subr.mxu0 0.0
    %1168 = vmatpush2.msra.mxu0 0.0
    %1169 = vmatprep.mubr.f32.mxu0 0.0
    %1170 = vmatmul.mubr.f32.gmra.mxu0 %v1100
    %v1171 = vpop.f32.mrf.mxu0
    %v1172 = vadd.f32 0.0, %v1171
    %v1173 = vpop.f32.mrf.mxu0
    %1174 = vmatprep.mubr.f32.mxu0 0.0
    %1175 = vmatmul.mubr.f32.gmra.mxu0 %v1103
    %v1176 = vpop.f32.mrf.mxu0
    %v1177 = vadd.f32 0.0, %v1176
    %v1178 = vpop.f32.mrf.mxu0
    %1179 = vdwg.mxu0
    %v1180 = vmul.f32 %v1172, %v1091
    %v1181 = vmul.f32 %v1177, %v1092
    %1184 = vrot.lane.b32.xlu0 %v1180, 24
    %v1185 = vpop.permute.xlu0 %1184
    %1186 = vrot.lane.b32.xlu0 %v1181, 24
    %v1187 = vpop.permute.xlu0 %1186
    %vm1190 = vcmask 261312
    %1191 = vst.msk [vmem:[#allocation2] sm:$0xff] %vm1190, %v1185
    %1192 = vst.msk [vmem:[#allocation2 + $0x8] sm:$0xff] %vm1190, %v1187
    %v1193 = vld [vmem:[#allocation2] sm:$0xff]
    %v1194 = vld [vmem:[#allocation2 + $0x8] sm:$0xff]
    %s1195 = scalar_lea.vmem [#allocation9], 32
    %v1196 = vld [vmem:[%s1195] sm:$0xff]
    %v1197 = vld [vmem:[%s1195 + $0x8] sm:$0xff]
    %v1198 = vld [vmem:[%s1195 + $0x10] sm:$0xff]
    %v1199 = vld [vmem:[%s1195 + $0x18] sm:$0xff]
    %v1200 = vlaneseq
    %v1201 = vshrl.u32 %v1200, 7
    %v1202 = vsub.s32 3, %v1201
    %v1203 = vrot.slane %v93, %v1202
    %v1205 = vsel %vm98, %v1193, 0
    %v1208 = vsel %vm98, %v1194, 0
    %1210 = vmatprep.subr.mxu0 0.0
    %1211 = vmatpush1.msra.mxu0 0.0
    %1212 = vmatprep.subr.mxu0 0.0
    %1213 = vmatpush1.msra.mxu0 0.0
    %1214 = vmatprep.subr.mxu0 0.0
    %1215 = vmatpush1.msra.mxu0 0.0
    %1216 = vmatprep.subr.mxu0 0.0
    %1217 = vmatpush1.msra.mxu0 0.0
    %1218 = vmatprep.subr.mxu0 0.0
    %1219 = vmatpush1.msra.mxu0 0.0
    %1220 = vmatprep.subr.mxu0 0.0
    %1221 = vmatpush1.msra.mxu0 0.0
    %1222 = vmatprep.subr.mxu0 0.0
    %1223 = vmatpush1.msra.mxu0 0.0
    %1224 = vmatprep.subr.mxu0 0.0
    %1225 = vmatpush1.msra.mxu0 0.0
    %1226 = vmatprep.subr.mxu0 0.0
    %1227 = vmatpush1.msra.mxu0 0.0
    %1228 = vmatprep.subr.mxu0 0.0
    %1229 = vmatpush1.msra.mxu0 0.0
    %1230 = vmatprep.subr.mxu0 0.0
    %1231 = vmatpush1.msra.mxu0 0.0
    %1232 = vmatprep.subr.mxu0 0.0
    %1233 = vmatpush1.msra.mxu0 0.0
    %1234 = vmatprep.subr.mxu0 0.0
    %1235 = vmatpush1.msra.mxu0 %v1199
    %1236 = vmatprep.subr.mxu0 0.0
    %1237 = vmatpush1.msra.mxu0 %v1198
    %1238 = vmatprep.subr.mxu0 0.0
    %1239 = vmatpush1.msra.mxu0 %v1197
    %1240 = vmatprep.subr.mxu0 0.0
    %1241 = vmatpush1.msra.mxu0 %v1196
    %1242 = vmatprep.subr.mxu0 0.0
    %1243 = vmatpush2.msra.mxu0 0.0
    %1244 = vmatprep.subr.mxu0 0.0
    %1245 = vmatpush2.msra.mxu0 0.0
    %1246 = vmatprep.subr.mxu0 0.0
    %1247 = vmatpush2.msra.mxu0 0.0
    %1248 = vmatprep.subr.mxu0 0.0
    %1249 = vmatpush2.msra.mxu0 0.0
    %1250 = vmatprep.subr.mxu0 0.0
    %1251 = vmatpush2.msra.mxu0 0.0
    %1252 = vmatprep.subr.mxu0 0.0
    %1253 = vmatpush2.msra.mxu0 0.0
    %1254 = vmatprep.subr.mxu0 0.0
    %1255 = vmatpush2.msra.mxu0 0.0
    %1256 = vmatprep.subr.mxu0 0.0
    %1257 = vmatpush2.msra.mxu0 0.0
    %1258 = vmatprep.subr.mxu0 0.0
    %1259 = vmatpush2.msra.mxu0 0.0
    %1260 = vmatprep.subr.mxu0 0.0
    %1261 = vmatpush2.msra.mxu0 0.0
    %1262 = vmatprep.subr.mxu0 0.0
    %1263 = vmatpush2.msra.mxu0 0.0
    %1264 = vmatprep.subr.mxu0 0.0
    %1265 = vmatpush2.msra.mxu0 0.0
    %1266 = vmatprep.subr.mxu0 0.0
    %1267 = vmatpush2.msra.mxu0 0.0
    %1268 = vmatprep.subr.mxu0 0.0
    %1269 = vmatpush2.msra.mxu0 0.0
    %1270 = vmatprep.subr.mxu0 0.0
    %1271 = vmatpush2.msra.mxu0 0.0
    %1272 = vmatprep.subr.mxu0 0.0
    %1273 = vmatpush2.msra.mxu0 0.0
    %1274 = vmatprep.mubr.f32.mxu0 0.0
    %1275 = vmatmul.mubr.f32.gmra.mxu0 %v1205
    %v1276 = vpop.f32.mrf.mxu0
    %v1277 = vadd.f32 %v1203, %v1276
    %v1278 = vpop.f32.mrf.mxu0
    %1279 = vmatprep.mubr.f32.mxu0 0.0
    %1280 = vmatmul.mubr.f32.gmra.mxu0 %v1208
    %v1281 = vpop.f32.mrf.mxu0
    %v1282 = vadd.f32 %v1203, %v1281
    %v1283 = vpop.f32.mrf.mxu0
    %1284 = vdwg.mxu0
    %v1285 = vadd.f32 %v87, %v1277
    %v1286 = vadd.f32 %v88, %v1282
    %v1287 = vsel %vm98, %v1285, 0.0
    %1288 = vadd.xlane.f32.xlu0 %v1287
    %v1289 = vpop.xlane.xlu0 %1288
    %v1290 = vsel %vm98, %v1286, 0.0
    %1291 = vadd.xlane.f32.xlu0 %v1290
    %v1292 = vpop.xlane.xlu0 %1291
    %v1293 = vrcp.pop 32.0
    %v1294 = vmul.f32 %v1289, %v1293
    %v1295 = vmul.f32 %v1292, %v1293
    %v1296 = vsub.f32 %v1285, %v1294
    %v1297 = vsub.f32 %v1286, %v1295
    %v1298 = vmul.f32 %v1296, %v1296
    %v1299 = vmul.f32 %v1297, %v1297
    %v1300 = vsel %vm98, %v1298, 0.0
    %1301 = vadd.xlane.f32.xlu0 %v1300
    %v1302 = vpop.xlane.xlu0 %1301
    %v1303 = vsel %vm98, %v1299, 0.0
    %1304 = vadd.xlane.f32.xlu0 %v1303
    %v1305 = vpop.xlane.xlu0 %1304
    %v1306 = vmul.f32 %v1302, %v1293
    %v1307 = vmul.f32 %v1305, %v1293
    %v1308 = vadd.f32 %v1306, 1e-05
    %v1309 = vadd.f32 %v1307, 1e-05
    %v1310 = vrsqrt.pop %v1308
    %v1311 = vrsqrt.pop %v1309
    %v1312 = vmul.f32 %v1296, %v1310
    %v1313 = vmul.f32 %v1297, %v1311
    %v1314 = vlaneseq
    %v1315 = vshrl.u32 %v1314, 7
    %v1316 = vsub.s32 4, %v1315
    %v1317 = vrot.slane %v93, %v1316
    %v1318 = vmul.f32 %v1312, %v1317
    %v1319 = vmul.f32 %v1313, %v1317
    %v1320 = vlaneseq
    %v1321 = vshrl.u32 %v1320, 7
    %v1322 = vsub.s32 5, %v1321
    %v1323 = vrot.slane %v93, %v1322
    %v1324 = vadd.f32 %v1318, %v1323
    %v1325 = vadd.f32 %v1319, %v1323
    %1326 = vst.msk [vmem:[#allocation12] sm:$0xff] %vm98, %v1324
    %1327 = vst.msk [vmem:[#allocation12 + $0x8] sm:$0xff] %vm98, %v1325
    // Predicated region
    $region42: #{encoder_forward.1} parent=1 // pred_check
      _
    $region43: #{encoder_forward.1} parent=1 // pred_check_branch
      %1329 = sbr.rel (0) target = $region45
    $region44: #{encoder_forward.1} parent=1 // pred_region
      %s1331 = ssub.s32 256, 256
      %1332 = vsyncadd [#allocation5], %s1331
      %s1333 = sshll.u32 [#allocation12], 4
      %s1334 = int_to_ptr.vmem [resolvable:$true] %s1333
      %1339 = dma.vmem_to_hbm [thread:$0]  %s1334, 256, %s5, [#allocation5], 128, 128, 8
    $region45: #{encoder_forward.1} parent=1 // pred_fallthru
      _
    // Predicated region
    $region46: #{encoder_forward.1} parent=1 // pred_check
      _
    $region47: #{encoder_forward.1} parent=1 // pred_check_branch
      %1341 = sbr.rel (0) target = $region49
    $region48: #{encoder_forward.1} parent=1 // pred_region
      %1342 = dma.done [#allocation5], 256
    $region49: #{encoder_forward.1} parent=1 // pred_fallthru
      _
    %1343 = vsyncpa [#allocation4], 1
    %1344 = vsyncpa [#allocation7], 1
    %1345 = vsyncpa [#allocation10], 1
    %1346 = vsyncpa [#allocation5], 1

</llo_original>
